<compile_context>
chip_gen: v5e
topology: v5e:2x2
jax: 0.10.0
libtpu: 0.0.40
codegen_flags: <defaults>
</compile_context>

<pallas_src>
import math
import functools

import jax
import jax.numpy as jnp
from jax import lax
from jax.experimental import pallas as pl
from jax.experimental.pallas import tpu as pltpu


def self_attention_kernel(x_ref, wq_ref, bq_ref, wk_ref, bk_ref, wv_ref, bv_ref,
                          mask_ref, o_ref, *, num_heads, head_dim, batch_block):
    # x_ref:  (bb, S, H) bf16
    # w*_ref: (nh, H, d) bf16, head-major; W_q already scaled by 1/sqrt(d)
    # b*_ref: (nh, 1, d) f32; b_q already scaled by 1/sqrt(d)
    # mask_ref: (bb, 1, S) f32 additive mask (broadcast over query rows)
    # o_ref:  (bb, S, H)
    for b in range(batch_block):
        x = x_ref[b]                         # (S, H) bf16
        mask_row = mask_ref[b]               # (1, S) f32

        for h in range(num_heads):           # static unroll (small head counts)
            lo = h * head_dim
            # Per-head Q/K/V projections (MXU, f32 accumulation). The head split
            # comes from the head-major weight layout -> no lane-offset slices.
            q = jnp.dot(x, wq_ref[h], preferred_element_type=jnp.float32) + bq_ref[h]
            k = jnp.dot(x, wk_ref[h], preferred_element_type=jnp.float32) + bk_ref[h]
            v = jnp.dot(x, wv_ref[h], preferred_element_type=jnp.float32) + bv_ref[h]
            q = q.astype(jnp.bfloat16)
            k = k.astype(jnp.bfloat16)
            v = v.astype(jnp.bfloat16)

            # Scores: contract over d on both operands (no explicit k transpose).
            # 1/sqrt(d) is already folded into W_q / b_q.
            s = lax.dot_general(q, k, dimension_numbers=(((1,), (1,)), ((), ())),
                                preferred_element_type=jnp.float32)    # (S, S) f32
            s = s + mask_row

            # Softmax numerator only; normalization is deferred until after the
            # PV matmul (S*d multiplies per head instead of S*S, and it is the
            # f32 accumulation that gets normalized).
            m = jnp.max(s, axis=-1, keepdims=True)
            p = jnp.exp(s - m)
            denom = jnp.sum(p, axis=-1, keepdims=True)

            ctx = jnp.dot(p.astype(jnp.bfloat16), v,
                          preferred_element_type=jnp.float32)           # (S, d) f32
            ctx = ctx * pl.reciprocal(denom, approx=True)               # EUP recip

            # Write this head's tile straight into the output block (no scratch).
            o_ref[b, :, lo:lo + head_dim] = ctx.astype(o_ref.dtype)


def visual_bert_self_attention(hidden_states, wq, bq, wk, bk, wv, bv,
                               attention_mask=None, *, num_heads):
    """hidden_states: (B, S, H); w*: (H, H) PyTorch (out_features, in_features);
    b*: (H,); attention_mask: additive HF extended mask (B, 1, 1, S) or None."""
    B, S, H = hidden_states.shape
    assert H % num_heads == 0
    head_dim = H // num_heads
    inv_sqrt_d = 1.0 / math.sqrt(head_dim)

    compute_dtype = jnp.bfloat16
    x = hidden_states.astype(compute_dtype)

    def head_major(w):
        # PyTorch (out, in) -> (in, out) -> (in, nh, d) -> (nh, in, d)
        return jnp.transpose(w.T.reshape(H, num_heads, head_dim), (1, 0, 2))

    # Fold the attention scale into the query projection (wrapper-side, free).
    wq_h = (head_major(wq) * inv_sqrt_d).astype(compute_dtype)
    wk_h = head_major(wk).astype(compute_dtype)
    wv_h = head_major(wv).astype(compute_dtype)
    bq_h = (bq * inv_sqrt_d).reshape(num_heads, 1, head_dim).astype(jnp.float32)
    bk_h = bk.reshape(num_heads, 1, head_dim).astype(jnp.float32)
    bv_h = bv.reshape(num_heads, 1, head_dim).astype(jnp.float32)

    if attention_mask is None:
        mask = jnp.zeros((B, 1, S), jnp.float32)
    else:
        mask = attention_mask.reshape(B, 1, S).astype(jnp.float32)   # slim mask

    # Several batch items per grid step when tiny (amortize per-step overhead);
    # otherwise one item per step to keep (S, S) score temporaries small.
    small = (S * H <= 128 * 128) and (B * S * H <= (1 << 20))
    bb = B if small else 1
    grid = (B // bb,)

    kernel = functools.partial(self_attention_kernel, num_heads=num_heads,
                               head_dim=head_dim, batch_block=bb)

    out_itemsize = jnp.dtype(hidden_states.dtype).itemsize
    flops = 2 * B * S * H * H * 3 + 2 * B * S * S * H * 2
    transcendentals = B * num_heads * S * S
    bytes_accessed = (B * S * H * 2            # x (bf16)
                      + 3 * H * H * 2          # weights (bf16)
                      + 3 * H * 4              # biases (f32)
                      + B * S * 4              # slim mask (f32)
                      + B * S * H * out_itemsize)

    # VMEM budget: double-buffered per-step blocks + weights + in-kernel
    # temporaries; capped at 48 MiB so it fits a v7x core's 64 MiB with headroom.
    step_blocks = bb * S * H * 2 + bb * S * H * out_itemsize + bb * S * 4
    weights_bytes = 3 * H * H * 2 + 3 * H * 4
    temporaries = bb * (3 * S * S * 4 + 10 * S * head_dim * 4)
    est = 2 * (step_blocks + weights_bytes) + temporaries
    vmem_limit = int(min(max(2 * est, 32 * 1024 * 1024), 48 * 1024 * 1024))

    return pl.pallas_call(
        kernel,
        out_shape=jax.ShapeDtypeStruct((B, S, H), hidden_states.dtype),
        grid_spec=pltpu.PrefetchScalarGridSpec(
            num_scalar_prefetch=0,
            grid=grid,
            in_specs=[
                pl.BlockSpec((bb, S, H), lambda i: (i, 0, 0)),                # x
                pl.BlockSpec((num_heads, H, head_dim), lambda i: (0, 0, 0)),  # W_q (scaled)
                pl.BlockSpec((num_heads, 1, head_dim), lambda i: (0, 0, 0)),  # b_q (scaled)
                pl.BlockSpec((num_heads, H, head_dim), lambda i: (0, 0, 0)),  # W_k
                pl.BlockSpec((num_heads, 1, head_dim), lambda i: (0, 0, 0)),  # b_k
                pl.BlockSpec((num_heads, H, head_dim), lambda i: (0, 0, 0)),  # W_v
                pl.BlockSpec((num_heads, 1, head_dim), lambda i: (0, 0, 0)),  # b_v
                pl.BlockSpec((bb, 1, S), lambda i: (i, 0, 0)),                # slim mask
            ],
            out_specs=pl.BlockSpec((bb, S, H), lambda i: (i, 0, 0)),
        ),
        compiler_params=pltpu.CompilerParams(
            dimension_semantics=("parallel",),
            vmem_limit_bytes=vmem_limit),
        cost_estimate=pl.CostEstimate(flops=flops,
                                      transcendentals=transcendentals,
                                      bytes_accessed=bytes_accessed),
    )(x, wq_h, bq_h, wk_h, bk_h, wv_h, bv_h, mask)


def reference_self_attention(x, wq, bq, wk, bk, wv, bv, mask, *, num_heads):
    B, S, H = x.shape
    d = H // num_heads
    q = x @ wq.T + bq
    k = x @ wk.T + bk
    v = x @ wv.T + bv

    def split(t):
        return t.reshape(B, S, num_heads, d).transpose(0, 2, 1, 3)

    q, k, v = split(q), split(k), split(v)
    scores = jnp.einsum('bhqd,bhkd->bhqk', q, k) / math.sqrt(d) + mask
    probs = jax.nn.softmax(scores, axis=-1)
    ctx = jnp.einsum('bhqk,bhkd->bhqd', probs, v)
    return ctx.transpose(0, 2, 1, 3).reshape(B, S, H)


if __name__ == "__main__":
    # Small config consistent with the module: hidden_size=32, num_attention_heads=4
    B, S, H, NH = 2, 8, 32, 4

    key = jax.random.PRNGKey(0)
    keys = jax.random.split(key, 8)
    x = jax.random.normal(keys[0], (B, S, H), dtype=jnp.float32)
    wq = jax.random.normal(keys[1], (H, H), dtype=jnp.float32) * 0.05
    bq = jax.random.normal(keys[2], (H,), dtype=jnp.float32) * 0.05
    wk = jax.random.normal(keys[3], (H, H), dtype=jnp.float32) * 0.05
    bk = jax.random.normal(keys[4], (H,), dtype=jnp.float32) * 0.05
    wv = jax.random.normal(keys[5], (H, H), dtype=jnp.float32) * 0.05
    bv = jax.random.normal(keys[6], (H,), dtype=jnp.float32) * 0.05
    # Additive attention mask (HF extended mask): 0 attended, -1e4 masked, (B,1,1,S).
    mask_bits = jax.random.bernoulli(keys[7], p=0.9, shape=(B, 1, 1, S))
    attention_mask = jnp.where(mask_bits, 0.0, -1e4).astype(jnp.float32)

    out = visual_bert_self_attention(x, wq, bq, wk, bk, wv, bv,
                                     attention_mask, num_heads=NH)
    out = jax.block_until_ready(out)

    ref = reference_self_attention(x, wq, bq, wk, bk, wv, bv,
                                   attention_mask, num_heads=NH)
    assert out.shape == (B, S, H)
    # bf16 matmul operands + approx reciprocal => relaxed tolerance vs f32 reference.
    assert jnp.allclose(out, ref, atol=2e-2, rtol=2e-2), "mismatch vs reference"

    print("KERNEL_OK")
</pallas_src>

<mosaic_0001>
module attributes {stable_mosaic.version = 11 : i64} {
  func.func @self_attention_kernel(%arg0: i32, %arg1: memref<2x8x32xbf16, #tpu.memory_space<vmem>>, %arg2: memref<4x32x8xbf16, #tpu.memory_space<vmem>>, %arg3: memref<4x1x8xf32, #tpu.memory_space<vmem>>, %arg4: memref<4x32x8xbf16, #tpu.memory_space<vmem>>, %arg5: memref<4x1x8xf32, #tpu.memory_space<vmem>>, %arg6: memref<4x32x8xbf16, #tpu.memory_space<vmem>>, %arg7: memref<4x1x8xf32, #tpu.memory_space<vmem>>, %arg8: memref<2x1x8xf32, #tpu.memory_space<vmem>>, %arg9: memref<2x8x32xf32, #tpu.memory_space<vmem>>) attributes {dimension_semantics = [#tpu.dimension_semantics<parallel>], iteration_bounds = array<i64: 1>, scalar_prefetch = 0 : i64, scratch_operands = 0 : i64, tpu.core_type = #tpu.core_type<tc>, window_params = [{transform_indices = @transform_0, window_bounds = array<i64: 2, 8, 32>}, {pipeline_mode = #tpu.pipeline_mode<synchronous>, transform_indices = @transform_1, window_bounds = array<i64: 4, 32, 8>}, {pipeline_mode = #tpu.pipeline_mode<synchronous>, transform_indices = @transform_2, window_bounds = array<i64: 4, 1, 8>}, {pipeline_mode = #tpu.pipeline_mode<synchronous>, transform_indices = @transform_3, window_bounds = array<i64: 4, 32, 8>}, {pipeline_mode = #tpu.pipeline_mode<synchronous>, transform_indices = @transform_4, window_bounds = array<i64: 4, 1, 8>}, {pipeline_mode = #tpu.pipeline_mode<synchronous>, transform_indices = @transform_5, window_bounds = array<i64: 4, 32, 8>}, {pipeline_mode = #tpu.pipeline_mode<synchronous>, transform_indices = @transform_6, window_bounds = array<i64: 4, 1, 8>}, {transform_indices = @transform_7, window_bounds = array<i64: 2, 1, 8>}, {transform_indices = @transform_8, window_bounds = array<i64: 2, 8, 32>}]} {
    %c0 = arith.constant 0 : index
    %c0_0 = arith.constant 0 : index
    %c0_1 = arith.constant 0 : index
    %0 = vector.load %arg1[%c0, %c0_0, %c0_1] : memref<2x8x32xbf16, #tpu.memory_space<vmem>>, vector<1x8x32xbf16>
    %1 = vector.shape_cast %0 : vector<1x8x32xbf16> to vector<8x32xbf16>
    %c0_2 = arith.constant 0 : index
    %c0_3 = arith.constant 0 : index
    %c0_4 = arith.constant 0 : index
    %2 = vector.load %arg8[%c0_2, %c0_3, %c0_4] : memref<2x1x8xf32, #tpu.memory_space<vmem>>, vector<1x1x8xf32>
    %3 = vector.shape_cast %2 : vector<1x1x8xf32> to vector<1x8xf32>
    %c0_5 = arith.constant 0 : index
    %c0_6 = arith.constant 0 : index
    %c0_7 = arith.constant 0 : index
    %4 = vector.load %arg2[%c0_5, %c0_6, %c0_7] : memref<4x32x8xbf16, #tpu.memory_space<vmem>>, vector<1x32x8xbf16>
    %5 = vector.shape_cast %4 : vector<1x32x8xbf16> to vector<32x8xbf16>
    %cst = arith.constant dense<0.000000e+00> : vector<8x8xf32>
    %6 = tpu.matmul %1, %5, %cst {dimension_numbers = #tpu.dot_dimension_numbers<[1], [0], [0], [1], [0, 0, 1, 1], [], []>} : vector<8x32xbf16>, vector<32x8xbf16>, vector<8x8xf32> -> vector<8x8xf32>
    %c0_8 = arith.constant 0 : index
    %c0_9 = arith.constant 0 : index
    %c0_10 = arith.constant 0 : index
    %7 = vector.load %arg3[%c0_8, %c0_9, %c0_10] : memref<4x1x8xf32, #tpu.memory_space<vmem>>, vector<1x1x8xf32>
    %8 = vector.shape_cast %7 : vector<1x1x8xf32> to vector<1x8xf32>
    %9 = vector.broadcast %8 : vector<1x8xf32> to vector<8x8xf32>
    %10 = arith.addf %6, %9 : vector<8x8xf32>
    %c0_11 = arith.constant 0 : index
    %c0_12 = arith.constant 0 : index
    %c0_13 = arith.constant 0 : index
    %11 = vector.load %arg4[%c0_11, %c0_12, %c0_13] : memref<4x32x8xbf16, #tpu.memory_space<vmem>>, vector<1x32x8xbf16>
    %12 = vector.shape_cast %11 : vector<1x32x8xbf16> to vector<32x8xbf16>
    %cst_14 = arith.constant dense<0.000000e+00> : vector<8x8xf32>
    %13 = tpu.matmul %1, %12, %cst_14 {dimension_numbers = #tpu.dot_dimension_numbers<[1], [0], [0], [1], [0, 0, 1, 1], [], []>} : vector<8x32xbf16>, vector<32x8xbf16>, vector<8x8xf32> -> vector<8x8xf32>
    %c0_15 = arith.constant 0 : index
    %c0_16 = arith.constant 0 : index
    %c0_17 = arith.constant 0 : index
    %14 = vector.load %arg5[%c0_15, %c0_16, %c0_17] : memref<4x1x8xf32, #tpu.memory_space<vmem>>, vector<1x1x8xf32>
    %15 = vector.shape_cast %14 : vector<1x1x8xf32> to vector<1x8xf32>
    %16 = vector.broadcast %15 : vector<1x8xf32> to vector<8x8xf32>
    %17 = arith.addf %13, %16 : vector<8x8xf32>
    %c0_18 = arith.constant 0 : index
    %c0_19 = arith.constant 0 : index
    %c0_20 = arith.constant 0 : index
    %18 = vector.load %arg6[%c0_18, %c0_19, %c0_20] : memref<4x32x8xbf16, #tpu.memory_space<vmem>>, vector<1x32x8xbf16>
    %19 = vector.shape_cast %18 : vector<1x32x8xbf16> to vector<32x8xbf16>
    %cst_21 = arith.constant dense<0.000000e+00> : vector<8x8xf32>
    %20 = tpu.matmul %1, %19, %cst_21 {dimension_numbers = #tpu.dot_dimension_numbers<[1], [0], [0], [1], [0, 0, 1, 1], [], []>} : vector<8x32xbf16>, vector<32x8xbf16>, vector<8x8xf32> -> vector<8x8xf32>
    %c0_22 = arith.constant 0 : index
    %c0_23 = arith.constant 0 : index
    %c0_24 = arith.constant 0 : index
    %21 = vector.load %arg7[%c0_22, %c0_23, %c0_24] : memref<4x1x8xf32, #tpu.memory_space<vmem>>, vector<1x1x8xf32>
    %22 = vector.shape_cast %21 : vector<1x1x8xf32> to vector<1x8xf32>
    %23 = vector.broadcast %22 : vector<1x8xf32> to vector<8x8xf32>
    %24 = arith.addf %20, %23 : vector<8x8xf32>
    %25 = arith.truncf %10 : vector<8x8xf32> to vector<8x8xbf16>
    %26 = arith.truncf %17 : vector<8x8xf32> to vector<8x8xbf16>
    %27 = arith.truncf %24 : vector<8x8xf32> to vector<8x8xbf16>
    %cst_25 = arith.constant dense<0.000000e+00> : vector<8x8xf32>
    %28 = tpu.matmul %25, %26, %cst_25 {dimension_numbers = #tpu.dot_dimension_numbers<[1], [1], [0], [0], [0, 0, 1, 0], [], []>} : vector<8x8xbf16>, vector<8x8xbf16>, vector<8x8xf32> -> vector<8x8xf32>
    %29 = vector.broadcast %3 : vector<1x8xf32> to vector<8x8xf32>
    %30 = arith.addf %28, %29 : vector<8x8xf32>
    %cst_26 = arith.constant dense<0xFF800000> : vector<8xf32>
    %31 = vector.multi_reduction <maximumf>, %30, %cst_26 [1] : vector<8x8xf32> to vector<8xf32>
    %32 = vector.shape_cast %31 : vector<8xf32> to vector<8x1xf32>
    %33 = vector.broadcast %32 : vector<8x1xf32> to vector<8x8xf32>
    %34 = arith.subf %30, %33 : vector<8x8xf32>
    %35 = math.exp %34 : vector<8x8xf32>
    %cst_27 = arith.constant dense<0.000000e+00> : vector<8xf32>
    %36 = vector.multi_reduction <add>, %35, %cst_27 [1] : vector<8x8xf32> to vector<8xf32>
    %37 = vector.shape_cast %36 : vector<8xf32> to vector<8x1xf32>
    %38 = arith.truncf %35 : vector<8x8xf32> to vector<8x8xbf16>
    %cst_28 = arith.constant dense<0.000000e+00> : vector<8x8xf32>
    %39 = tpu.matmul %38, %27, %cst_28 {dimension_numbers = #tpu.dot_dimension_numbers<[1], [0], [0], [1], [0, 0, 1, 1], [], []>} : vector<8x8xbf16>, vector<8x8xbf16>, vector<8x8xf32> -> vector<8x8xf32>
    %40 = tpu.reciprocal %37 {approx = true} : vector<8x1xf32> -> vector<8x1xf32>
    %41 = vector.broadcast %40 : vector<8x1xf32> to vector<8x8xf32>
    %42 = arith.mulf %39, %41 : vector<8x8xf32>
    %c0_29 = arith.constant 0 : index
    %c0_30 = arith.constant 0 : index
    %c0_31 = arith.constant 0 : index
    %43 = vector.load %arg9[%c0_29, %c0_30, %c0_31] : memref<2x8x32xf32, #tpu.memory_space<vmem>>, vector<1x8x8xf32>
    %44 = vector.shape_cast %43 : vector<1x8x8xf32> to vector<8x8xf32>
    %45 = vector.shape_cast %42 : vector<8x8xf32> to vector<1x8x8xf32>
    tpu.vector_store %arg9[%c0_29, %c0_30, %c0_31], %45 {strides = array<i32>} : memref<2x8x32xf32, #tpu.memory_space<vmem>>, vector<1x8x8xf32>,
    %c1 = arith.constant 1 : index
    %c0_32 = arith.constant 0 : index
    %c0_33 = arith.constant 0 : index
    %46 = vector.load %arg2[%c1, %c0_32, %c0_33] : memref<4x32x8xbf16, #tpu.memory_space<vmem>>, vector<1x32x8xbf16>
    %47 = vector.shape_cast %46 : vector<1x32x8xbf16> to vector<32x8xbf16>
    %cst_34 = arith.constant dense<0.000000e+00> : vector<8x8xf32>
    %48 = tpu.matmul %1, %47, %cst_34 {dimension_numbers = #tpu.dot_dimension_numbers<[1], [0], [0], [1], [0, 0, 1, 1], [], []>} : vector<8x32xbf16>, vector<32x8xbf16>, vector<8x8xf32> -> vector<8x8xf32>
    %c1_35 = arith.constant 1 : index
    %c0_36 = arith.constant 0 : index
    %c0_37 = arith.constant 0 : index
    %49 = vector.load %arg3[%c1_35, %c0_36, %c0_37] : memref<4x1x8xf32, #tpu.memory_space<vmem>>, vector<1x1x8xf32>
    %50 = vector.shape_cast %49 : vector<1x1x8xf32> to vector<1x8xf32>
    %51 = vector.broadcast %50 : vector<1x8xf32> to vector<8x8xf32>
    %52 = arith.addf %48, %51 : vector<8x8xf32>
    %c1_38 = arith.constant 1 : index
    %c0_39 = arith.constant 0 : index
    %c0_40 = arith.constant 0 : index
    %53 = vector.load %arg4[%c1_38, %c0_39, %c0_40] : memref<4x32x8xbf16, #tpu.memory_space<vmem>>, vector<1x32x8xbf16>
    %54 = vector.shape_cast %53 : vector<1x32x8xbf16> to vector<32x8xbf16>
    %cst_41 = arith.constant dense<0.000000e+00> : vector<8x8xf32>
    %55 = tpu.matmul %1, %54, %cst_41 {dimension_numbers = #tpu.dot_dimension_numbers<[1], [0], [0], [1], [0, 0, 1, 1], [], []>} : vector<8x32xbf16>, vector<32x8xbf16>, vector<8x8xf32> -> vector<8x8xf32>
    %c1_42 = arith.constant 1 : index
    %c0_43 = arith.constant 0 : index
    %c0_44 = arith.constant 0 : index
    %56 = vector.load %arg5[%c1_42, %c0_43, %c0_44] : memref<4x1x8xf32, #tpu.memory_space<vmem>>, vector<1x1x8xf32>
    %57 = vector.shape_cast %56 : vector<1x1x8xf32> to vector<1x8xf32>
    %58 = vector.broadcast %57 : vector<1x8xf32> to vector<8x8xf32>
    %59 = arith.addf %55, %58 : vector<8x8xf32>
    %c1_45 = arith.constant 1 : index
    %c0_46 = arith.constant 0 : index
    %c0_47 = arith.constant 0 : index
    %60 = vector.load %arg6[%c1_45, %c0_46, %c0_47] : memref<4x32x8xbf16, #tpu.memory_space<vmem>>, vector<1x32x8xbf16>
    %61 = vector.shape_cast %60 : vector<1x32x8xbf16> to vector<32x8xbf16>
    %cst_48 = arith.constant dense<0.000000e+00> : vector<8x8xf32>
    %62 = tpu.matmul %1, %61, %cst_48 {dimension_numbers = #tpu.dot_dimension_numbers<[1], [0], [0], [1], [0, 0, 1, 1], [], []>} : vector<8x32xbf16>, vector<32x8xbf16>, vector<8x8xf32> -> vector<8x8xf32>
    %c1_49 = arith.constant 1 : index
    %c0_50 = arith.constant 0 : index
    %c0_51 = arith.constant 0 : index
    %63 = vector.load %arg7[%c1_49, %c0_50, %c0_51] : memref<4x1x8xf32, #tpu.memory_space<vmem>>, vector<1x1x8xf32>
    %64 = vector.shape_cast %63 : vector<1x1x8xf32> to vector<1x8xf32>
    %65 = vector.broadcast %64 : vector<1x8xf32> to vector<8x8xf32>
    %66 = arith.addf %62, %65 : vector<8x8xf32>
    %67 = arith.truncf %52 : vector<8x8xf32> to vector<8x8xbf16>
    %68 = arith.truncf %59 : vector<8x8xf32> to vector<8x8xbf16>
    %69 = arith.truncf %66 : vector<8x8xf32> to vector<8x8xbf16>
    %cst_52 = arith.constant dense<0.000000e+00> : vector<8x8xf32>
    %70 = tpu.matmul %67, %68, %cst_52 {dimension_numbers = #tpu.dot_dimension_numbers<[1], [1], [0], [0], [0, 0, 1, 0], [], []>} : vector<8x8xbf16>, vector<8x8xbf16>, vector<8x8xf32> -> vector<8x8xf32>
    %71 = vector.broadcast %3 : vector<1x8xf32> to vector<8x8xf32>
    %72 = arith.addf %70, %71 : vector<8x8xf32>
    %cst_53 = arith.constant dense<0xFF800000> : vector<8xf32>
    %73 = vector.multi_reduction <maximumf>, %72, %cst_53 [1] : vector<8x8xf32> to vector<8xf32>
    %74 = vector.shape_cast %73 : vector<8xf32> to vector<8x1xf32>
    %75 = vector.broadcast %74 : vector<8x1xf32> to vector<8x8xf32>
    %76 = arith.subf %72, %75 : vector<8x8xf32>
    %77 = math.exp %76 : vector<8x8xf32>
    %cst_54 = arith.constant dense<0.000000e+00> : vector<8xf32>
    %78 = vector.multi_reduction <add>, %77, %cst_54 [1] : vector<8x8xf32> to vector<8xf32>
    %79 = vector.shape_cast %78 : vector<8xf32> to vector<8x1xf32>
    %80 = arith.truncf %77 : vector<8x8xf32> to vector<8x8xbf16>
    %cst_55 = arith.constant dense<0.000000e+00> : vector<8x8xf32>
    %81 = tpu.matmul %80, %69, %cst_55 {dimension_numbers = #tpu.dot_dimension_numbers<[1], [0], [0], [1], [0, 0, 1, 1], [], []>} : vector<8x8xbf16>, vector<8x8xbf16>, vector<8x8xf32> -> vector<8x8xf32>
    %82 = tpu.reciprocal %79 {approx = true} : vector<8x1xf32> -> vector<8x1xf32>
    %83 = vector.broadcast %82 : vector<8x1xf32> to vector<8x8xf32>
    %84 = arith.mulf %81, %83 : vector<8x8xf32>
    %c0_56 = arith.constant 0 : index
    %c0_57 = arith.constant 0 : index
    %c8 = arith.constant 8 : index
    %85 = vector.load %arg9[%c0_56, %c0_57, %c8] : memref<2x8x32xf32, #tpu.memory_space<vmem>>, vector<1x8x8xf32>
    %86 = vector.shape_cast %85 : vector<1x8x8xf32> to vector<8x8xf32>
    %87 = vector.shape_cast %84 : vector<8x8xf32> to vector<1x8x8xf32>
    tpu.vector_store %arg9[%c0_56, %c0_57, %c8], %87 {strides = array<i32>} : memref<2x8x32xf32, #tpu.memory_space<vmem>>, vector<1x8x8xf32>,
    %c2 = arith.constant 2 : index
    %c0_58 = arith.constant 0 : index
    %c0_59 = arith.constant 0 : index
    %88 = vector.load %arg2[%c2, %c0_58, %c0_59] : memref<4x32x8xbf16, #tpu.memory_space<vmem>>, vector<1x32x8xbf16>
    %89 = vector.shape_cast %88 : vector<1x32x8xbf16> to vector<32x8xbf16>
    %cst_60 = arith.constant dense<0.000000e+00> : vector<8x8xf32>
    %90 = tpu.matmul %1, %89, %cst_60 {dimension_numbers = #tpu.dot_dimension_numbers<[1], [0], [0], [1], [0, 0, 1, 1], [], []>} : vector<8x32xbf16>, vector<32x8xbf16>, vector<8x8xf32> -> vector<8x8xf32>
    %c2_61 = arith.constant 2 : index
    %c0_62 = arith.constant 0 : index
    %c0_63 = arith.constant 0 : index
    %91 = vector.load %arg3[%c2_61, %c0_62, %c0_63] : memref<4x1x8xf32, #tpu.memory_space<vmem>>, vector<1x1x8xf32>
    %92 = vector.shape_cast %91 : vector<1x1x8xf32> to vector<1x8xf32>
    %93 = vector.broadcast %92 : vector<1x8xf32> to vector<8x8xf32>
    %94 = arith.addf %90, %93 : vector<8x8xf32>
    %c2_64 = arith.constant 2 : index
    %c0_65 = arith.constant 0 : index
    %c0_66 = arith.constant 0 : index
    %95 = vector.load %arg4[%c2_64, %c0_65, %c0_66] : memref<4x32x8xbf16, #tpu.memory_space<vmem>>, vector<1x32x8xbf16>
    %96 = vector.shape_cast %95 : vector<1x32x8xbf16> to vector<32x8xbf16>
    %cst_67 = arith.constant dense<0.000000e+00> : vector<8x8xf32>
    %97 = tpu.matmul %1, %96, %cst_67 {dimension_numbers = #tpu.dot_dimension_numbers<[1], [0], [0], [1], [0, 0, 1, 1], [], []>} : vector<8x32xbf16>, vector<32x8xbf16>, vector<8x8xf32> -> vector<8x8xf32>
    %c2_68 = arith.constant 2 : index
    %c0_69 = arith.constant 0 : index
    %c0_70 = arith.constant 0 : index
    %98 = vector.load %arg5[%c2_68, %c0_69, %c0_70] : memref<4x1x8xf32, #tpu.memory_space<vmem>>, vector<1x1x8xf32>
    %99 = vector.shape_cast %98 : vector<1x1x8xf32> to vector<1x8xf32>
    %100 = vector.broadcast %99 : vector<1x8xf32> to vector<8x8xf32>
    %101 = arith.addf %97, %100 : vector<8x8xf32>
    %c2_71 = arith.constant 2 : index
    %c0_72 = arith.constant 0 : index
    %c0_73 = arith.constant 0 : index
    %102 = vector.load %arg6[%c2_71, %c0_72, %c0_73] : memref<4x32x8xbf16, #tpu.memory_space<vmem>>, vector<1x32x8xbf16>
    %103 = vector.shape_cast %102 : vector<1x32x8xbf16> to vector<32x8xbf16>
    %cst_74 = arith.constant dense<0.000000e+00> : vector<8x8xf32>
    %104 = tpu.matmul %1, %103, %cst_74 {dimension_numbers = #tpu.dot_dimension_numbers<[1], [0], [0], [1], [0, 0, 1, 1], [], []>} : vector<8x32xbf16>, vector<32x8xbf16>, vector<8x8xf32> -> vector<8x8xf32>
    %c2_75 = arith.constant 2 : index
    %c0_76 = arith.constant 0 : index
    %c0_77 = arith.constant 0 : index
    %105 = vector.load %arg7[%c2_75, %c0_76, %c0_77] : memref<4x1x8xf32, #tpu.memory_space<vmem>>, vector<1x1x8xf32>
    %106 = vector.shape_cast %105 : vector<1x1x8xf32> to vector<1x8xf32>
    %107 = vector.broadcast %106 : vector<1x8xf32> to vector<8x8xf32>
    %108 = arith.addf %104, %107 : vector<8x8xf32>
    %109 = arith.truncf %94 : vector<8x8xf32> to vector<8x8xbf16>
    %110 = arith.truncf %101 : vector<8x8xf32> to vector<8x8xbf16>
    %111 = arith.truncf %108 : vector<8x8xf32> to vector<8x8xbf16>
    %cst_78 = arith.constant dense<0.000000e+00> : vector<8x8xf32>
    %112 = tpu.matmul %109, %110, %cst_78 {dimension_numbers = #tpu.dot_dimension_numbers<[1], [1], [0], [0], [0, 0, 1, 0], [], []>} : vector<8x8xbf16>, vector<8x8xbf16>, vector<8x8xf32> -> vector<8x8xf32>
    %113 = vector.broadcast %3 : vector<1x8xf32> to vector<8x8xf32>
    %114 = arith.addf %112, %113 : vector<8x8xf32>
    %cst_79 = arith.constant dense<0xFF800000> : vector<8xf32>
    %115 = vector.multi_reduction <maximumf>, %114, %cst_79 [1] : vector<8x8xf32> to vector<8xf32>
    %116 = vector.shape_cast %115 : vector<8xf32> to vector<8x1xf32>
    %117 = vector.broadcast %116 : vector<8x1xf32> to vector<8x8xf32>
    %118 = arith.subf %114, %117 : vector<8x8xf32>
    %119 = math.exp %118 : vector<8x8xf32>
    %cst_80 = arith.constant dense<0.000000e+00> : vector<8xf32>
    %120 = vector.multi_reduction <add>, %119, %cst_80 [1] : vector<8x8xf32> to vector<8xf32>
    %121 = vector.shape_cast %120 : vector<8xf32> to vector<8x1xf32>
    %122 = arith.truncf %119 : vector<8x8xf32> to vector<8x8xbf16>
    %cst_81 = arith.constant dense<0.000000e+00> : vector<8x8xf32>
    %123 = tpu.matmul %122, %111, %cst_81 {dimension_numbers = #tpu.dot_dimension_numbers<[1], [0], [0], [1], [0, 0, 1, 1], [], []>} : vector<8x8xbf16>, vector<8x8xbf16>, vector<8x8xf32> -> vector<8x8xf32>
    %124 = tpu.reciprocal %121 {approx = true} : vector<8x1xf32> -> vector<8x1xf32>
    %125 = vector.broadcast %124 : vector<8x1xf32> to vector<8x8xf32>
    %126 = arith.mulf %123, %125 : vector<8x8xf32>
    %c0_82 = arith.constant 0 : index
    %c0_83 = arith.constant 0 : index
    %c16 = arith.constant 16 : index
    %127 = vector.load %arg9[%c0_82, %c0_83, %c16] : memref<2x8x32xf32, #tpu.memory_space<vmem>>, vector<1x8x8xf32>
    %128 = vector.shape_cast %127 : vector<1x8x8xf32> to vector<8x8xf32>
    %129 = vector.shape_cast %126 : vector<8x8xf32> to vector<1x8x8xf32>
    tpu.vector_store %arg9[%c0_82, %c0_83, %c16], %129 {strides = array<i32>} : memref<2x8x32xf32, #tpu.memory_space<vmem>>, vector<1x8x8xf32>,
    %c3 = arith.constant 3 : index
    %c0_84 = arith.constant 0 : index
    %c0_85 = arith.constant 0 : index
    %130 = vector.load %arg2[%c3, %c0_84, %c0_85] : memref<4x32x8xbf16, #tpu.memory_space<vmem>>, vector<1x32x8xbf16>
    %131 = vector.shape_cast %130 : vector<1x32x8xbf16> to vector<32x8xbf16>
    %cst_86 = arith.constant dense<0.000000e+00> : vector<8x8xf32>
    %132 = tpu.matmul %1, %131, %cst_86 {dimension_numbers = #tpu.dot_dimension_numbers<[1], [0], [0], [1], [0, 0, 1, 1], [], []>} : vector<8x32xbf16>, vector<32x8xbf16>, vector<8x8xf32> -> vector<8x8xf32>
    %c3_87 = arith.constant 3 : index
    %c0_88 = arith.constant 0 : index
    %c0_89 = arith.constant 0 : index
    %133 = vector.load %arg3[%c3_87, %c0_88, %c0_89] : memref<4x1x8xf32, #tpu.memory_space<vmem>>, vector<1x1x8xf32>
    %134 = vector.shape_cast %133 : vector<1x1x8xf32> to vector<1x8xf32>
    %135 = vector.broadcast %134 : vector<1x8xf32> to vector<8x8xf32>
    %136 = arith.addf %132, %135 : vector<8x8xf32>
    %c3_90 = arith.constant 3 : index
    %c0_91 = arith.constant 0 : index
    %c0_92 = arith.constant 0 : index
    %137 = vector.load %arg4[%c3_90, %c0_91, %c0_92] : memref<4x32x8xbf16, #tpu.memory_space<vmem>>, vector<1x32x8xbf16>
    %138 = vector.shape_cast %137 : vector<1x32x8xbf16> to vector<32x8xbf16>
    %cst_93 = arith.constant dense<0.000000e+00> : vector<8x8xf32>
    %139 = tpu.matmul %1, %138, %cst_93 {dimension_numbers = #tpu.dot_dimension_numbers<[1], [0], [0], [1], [0, 0, 1, 1], [], []>} : vector<8x32xbf16>, vector<32x8xbf16>, vector<8x8xf32> -> vector<8x8xf32>
    %c3_94 = arith.constant 3 : index
    %c0_95 = arith.constant 0 : index
    %c0_96 = arith.constant 0 : index
    %140 = vector.load %arg5[%c3_94, %c0_95, %c0_96] : memref<4x1x8xf32, #tpu.memory_space<vmem>>, vector<1x1x8xf32>
    %141 = vector.shape_cast %140 : vector<1x1x8xf32> to vector<1x8xf32>
    %142 = vector.broadcast %141 : vector<1x8xf32> to vector<8x8xf32>
    %143 = arith.addf %139, %142 : vector<8x8xf32>
    %c3_97 = arith.constant 3 : index
    %c0_98 = arith.constant 0 : index
    %c0_99 = arith.constant 0 : index
    %144 = vector.load %arg6[%c3_97, %c0_98, %c0_99] : memref<4x32x8xbf16, #tpu.memory_space<vmem>>, vector<1x32x8xbf16>
    %145 = vector.shape_cast %144 : vector<1x32x8xbf16> to vector<32x8xbf16>
    %cst_100 = arith.constant dense<0.000000e+00> : vector<8x8xf32>
    %146 = tpu.matmul %1, %145, %cst_100 {dimension_numbers = #tpu.dot_dimension_numbers<[1], [0], [0], [1], [0, 0, 1, 1], [], []>} : vector<8x32xbf16>, vector<32x8xbf16>, vector<8x8xf32> -> vector<8x8xf32>
    %c3_101 = arith.constant 3 : index
    %c0_102 = arith.constant 0 : index
    %c0_103 = arith.constant 0 : index
    %147 = vector.load %arg7[%c3_101, %c0_102, %c0_103] : memref<4x1x8xf32, #tpu.memory_space<vmem>>, vector<1x1x8xf32>
    %148 = vector.shape_cast %147 : vector<1x1x8xf32> to vector<1x8xf32>
    %149 = vector.broadcast %148 : vector<1x8xf32> to vector<8x8xf32>
    %150 = arith.addf %146, %149 : vector<8x8xf32>
    %151 = arith.truncf %136 : vector<8x8xf32> to vector<8x8xbf16>
    %152 = arith.truncf %143 : vector<8x8xf32> to vector<8x8xbf16>
    %153 = arith.truncf %150 : vector<8x8xf32> to vector<8x8xbf16>
    %cst_104 = arith.constant dense<0.000000e+00> : vector<8x8xf32>
    %154 = tpu.matmul %151, %152, %cst_104 {dimension_numbers = #tpu.dot_dimension_numbers<[1], [1], [0], [0], [0, 0, 1, 0], [], []>} : vector<8x8xbf16>, vector<8x8xbf16>, vector<8x8xf32> -> vector<8x8xf32>
    %155 = vector.broadcast %3 : vector<1x8xf32> to vector<8x8xf32>
    %156 = arith.addf %154, %155 : vector<8x8xf32>
    %cst_105 = arith.constant dense<0xFF800000> : vector<8xf32>
    %157 = vector.multi_reduction <maximumf>, %156, %cst_105 [1] : vector<8x8xf32> to vector<8xf32>
    %158 = vector.shape_cast %157 : vector<8xf32> to vector<8x1xf32>
    %159 = vector.broadcast %158 : vector<8x1xf32> to vector<8x8xf32>
    %160 = arith.subf %156, %159 : vector<8x8xf32>
    %161 = math.exp %160 : vector<8x8xf32>
    %cst_106 = arith.constant dense<0.000000e+00> : vector<8xf32>
    %162 = vector.multi_reduction <add>, %161, %cst_106 [1] : vector<8x8xf32> to vector<8xf32>
    %163 = vector.shape_cast %162 : vector<8xf32> to vector<8x1xf32>
    %164 = arith.truncf %161 : vector<8x8xf32> to vector<8x8xbf16>
    %cst_107 = arith.constant dense<0.000000e+00> : vector<8x8xf32>
    %165 = tpu.matmul %164, %153, %cst_107 {dimension_numbers = #tpu.dot_dimension_numbers<[1], [0], [0], [1], [0, 0, 1, 1], [], []>} : vector<8x8xbf16>, vector<8x8xbf16>, vector<8x8xf32> -> vector<8x8xf32>
    %166 = tpu.reciprocal %163 {approx = true} : vector<8x1xf32> -> vector<8x1xf32>
    %167 = vector.broadcast %166 : vector<8x1xf32> to vector<8x8xf32>
    %168 = arith.mulf %165, %167 : vector<8x8xf32>
    %c0_108 = arith.constant 0 : index
    %c0_109 = arith.constant 0 : index
    %c24 = arith.constant 24 : index
    %169 = vector.load %arg9[%c0_108, %c0_109, %c24] : memref<2x8x32xf32, #tpu.memory_space<vmem>>, vector<1x8x8xf32>
    %170 = vector.shape_cast %169 : vector<1x8x8xf32> to vector<8x8xf32>
    %171 = vector.shape_cast %168 : vector<8x8xf32> to vector<1x8x8xf32>
    tpu.vector_store %arg9[%c0_108, %c0_109, %c24], %171 {strides = array<i32>} : memref<2x8x32xf32, #tpu.memory_space<vmem>>, vector<1x8x8xf32>,
    %c1_110 = arith.constant 1 : index
    %c0_111 = arith.constant 0 : index
    %c0_112 = arith.constant 0 : index
    %172 = vector.load %arg1[%c1_110, %c0_111, %c0_112] : memref<2x8x32xbf16, #tpu.memory_space<vmem>>, vector<1x8x32xbf16>
    %173 = vector.shape_cast %172 : vector<1x8x32xbf16> to vector<8x32xbf16>
    %c1_113 = arith.constant 1 : index
    %c0_114 = arith.constant 0 : index
    %c0_115 = arith.constant 0 : index
    %174 = vector.load %arg8[%c1_113, %c0_114, %c0_115] : memref<2x1x8xf32, #tpu.memory_space<vmem>>, vector<1x1x8xf32>
    %175 = vector.shape_cast %174 : vector<1x1x8xf32> to vector<1x8xf32>
    %c0_116 = arith.constant 0 : index
    %c0_117 = arith.constant 0 : index
    %c0_118 = arith.constant 0 : index
    %176 = vector.load %arg2[%c0_116, %c0_117, %c0_118] : memref<4x32x8xbf16, #tpu.memory_space<vmem>>, vector<1x32x8xbf16>
    %177 = vector.shape_cast %176 : vector<1x32x8xbf16> to vector<32x8xbf16>
    %cst_119 = arith.constant dense<0.000000e+00> : vector<8x8xf32>
    %178 = tpu.matmul %173, %177, %cst_119 {dimension_numbers = #tpu.dot_dimension_numbers<[1], [0], [0], [1], [0, 0, 1, 1], [], []>} : vector<8x32xbf16>, vector<32x8xbf16>, vector<8x8xf32> -> vector<8x8xf32>
    %c0_120 = arith.constant 0 : index
    %c0_121 = arith.constant 0 : index
    %c0_122 = arith.constant 0 : index
    %179 = vector.load %arg3[%c0_120, %c0_121, %c0_122] : memref<4x1x8xf32, #tpu.memory_space<vmem>>, vector<1x1x8xf32>
    %180 = vector.shape_cast %179 : vector<1x1x8xf32> to vector<1x8xf32>
    %181 = vector.broadcast %180 : vector<1x8xf32> to vector<8x8xf32>
    %182 = arith.addf %178, %181 : vector<8x8xf32>
    %c0_123 = arith.constant 0 : index
    %c0_124 = arith.constant 0 : index
    %c0_125 = arith.constant 0 : index
    %183 = vector.load %arg4[%c0_123, %c0_124, %c0_125] : memref<4x32x8xbf16, #tpu.memory_space<vmem>>, vector<1x32x8xbf16>
    %184 = vector.shape_cast %183 : vector<1x32x8xbf16> to vector<32x8xbf16>
    %cst_126 = arith.constant dense<0.000000e+00> : vector<8x8xf32>
    %185 = tpu.matmul %173, %184, %cst_126 {dimension_numbers = #tpu.dot_dimension_numbers<[1], [0], [0], [1], [0, 0, 1, 1], [], []>} : vector<8x32xbf16>, vector<32x8xbf16>, vector<8x8xf32> -> vector<8x8xf32>
    %c0_127 = arith.constant 0 : index
    %c0_128 = arith.constant 0 : index
    %c0_129 = arith.constant 0 : index
    %186 = vector.load %arg5[%c0_127, %c0_128, %c0_129] : memref<4x1x8xf32, #tpu.memory_space<vmem>>, vector<1x1x8xf32>
    %187 = vector.shape_cast %186 : vector<1x1x8xf32> to vector<1x8xf32>
    %188 = vector.broadcast %187 : vector<1x8xf32> to vector<8x8xf32>
    %189 = arith.addf %185, %188 : vector<8x8xf32>
    %c0_130 = arith.constant 0 : index
    %c0_131 = arith.constant 0 : index
    %c0_132 = arith.constant 0 : index
    %190 = vector.load %arg6[%c0_130, %c0_131, %c0_132] : memref<4x32x8xbf16, #tpu.memory_space<vmem>>, vector<1x32x8xbf16>
    %191 = vector.shape_cast %190 : vector<1x32x8xbf16> to vector<32x8xbf16>
    %cst_133 = arith.constant dense<0.000000e+00> : vector<8x8xf32>
    %192 = tpu.matmul %173, %191, %cst_133 {dimension_numbers = #tpu.dot_dimension_numbers<[1], [0], [0], [1], [0, 0, 1, 1], [], []>} : vector<8x32xbf16>, vector<32x8xbf16>, vector<8x8xf32> -> vector<8x8xf32>
    %c0_134 = arith.constant 0 : index
    %c0_135 = arith.constant 0 : index
    %c0_136 = arith.constant 0 : index
    %193 = vector.load %arg7[%c0_134, %c0_135, %c0_136] : memref<4x1x8xf32, #tpu.memory_space<vmem>>, vector<1x1x8xf32>
    %194 = vector.shape_cast %193 : vector<1x1x8xf32> to vector<1x8xf32>
    %195 = vector.broadcast %194 : vector<1x8xf32> to vector<8x8xf32>
    %196 = arith.addf %192, %195 : vector<8x8xf32>
    %197 = arith.truncf %182 : vector<8x8xf32> to vector<8x8xbf16>
    %198 = arith.truncf %189 : vector<8x8xf32> to vector<8x8xbf16>
    %199 = arith.truncf %196 : vector<8x8xf32> to vector<8x8xbf16>
    %cst_137 = arith.constant dense<0.000000e+00> : vector<8x8xf32>
    %200 = tpu.matmul %197, %198, %cst_137 {dimension_numbers = #tpu.dot_dimension_numbers<[1], [1], [0], [0], [0, 0, 1, 0], [], []>} : vector<8x8xbf16>, vector<8x8xbf16>, vector<8x8xf32> -> vector<8x8xf32>
    %201 = vector.broadcast %175 : vector<1x8xf32> to vector<8x8xf32>
    %202 = arith.addf %200, %201 : vector<8x8xf32>
    %cst_138 = arith.constant dense<0xFF800000> : vector<8xf32>
    %203 = vector.multi_reduction <maximumf>, %202, %cst_138 [1] : vector<8x8xf32> to vector<8xf32>
    %204 = vector.shape_cast %203 : vector<8xf32> to vector<8x1xf32>
    %205 = vector.broadcast %204 : vector<8x1xf32> to vector<8x8xf32>
    %206 = arith.subf %202, %205 : vector<8x8xf32>
    %207 = math.exp %206 : vector<8x8xf32>
    %cst_139 = arith.constant dense<0.000000e+00> : vector<8xf32>
    %208 = vector.multi_reduction <add>, %207, %cst_139 [1] : vector<8x8xf32> to vector<8xf32>
    %209 = vector.shape_cast %208 : vector<8xf32> to vector<8x1xf32>
    %210 = arith.truncf %207 : vector<8x8xf32> to vector<8x8xbf16>
    %cst_140 = arith.constant dense<0.000000e+00> : vector<8x8xf32>
    %211 = tpu.matmul %210, %199, %cst_140 {dimension_numbers = #tpu.dot_dimension_numbers<[1], [0], [0], [1], [0, 0, 1, 1], [], []>} : vector<8x8xbf16>, vector<8x8xbf16>, vector<8x8xf32> -> vector<8x8xf32>
    %212 = tpu.reciprocal %209 {approx = true} : vector<8x1xf32> -> vector<8x1xf32>
    %213 = vector.broadcast %212 : vector<8x1xf32> to vector<8x8xf32>
    %214 = arith.mulf %211, %213 : vector<8x8xf32>
    %c1_141 = arith.constant 1 : index
    %c0_142 = arith.constant 0 : index
    %c0_143 = arith.constant 0 : index
    %215 = vector.load %arg9[%c1_141, %c0_142, %c0_143] : memref<2x8x32xf32, #tpu.memory_space<vmem>>, vector<1x8x8xf32>
    %216 = vector.shape_cast %215 : vector<1x8x8xf32> to vector<8x8xf32>
    %217 = vector.shape_cast %214 : vector<8x8xf32> to vector<1x8x8xf32>
    tpu.vector_store %arg9[%c1_141, %c0_142, %c0_143], %217 {strides = array<i32>} : memref<2x8x32xf32, #tpu.memory_space<vmem>>, vector<1x8x8xf32>,
    %c1_144 = arith.constant 1 : index
    %c0_145 = arith.constant 0 : index
    %c0_146 = arith.constant 0 : index
    %218 = vector.load %arg2[%c1_144, %c0_145, %c0_146] : memref<4x32x8xbf16, #tpu.memory_space<vmem>>, vector<1x32x8xbf16>
    %219 = vector.shape_cast %218 : vector<1x32x8xbf16> to vector<32x8xbf16>
    %cst_147 = arith.constant dense<0.000000e+00> : vector<8x8xf32>
    %220 = tpu.matmul %173, %219, %cst_147 {dimension_numbers = #tpu.dot_dimension_numbers<[1], [0], [0], [1], [0, 0, 1, 1], [], []>} : vector<8x32xbf16>, vector<32x8xbf16>, vector<8x8xf32> -> vector<8x8xf32>
    %c1_148 = arith.constant 1 : index
    %c0_149 = arith.constant 0 : index
    %c0_150 = arith.constant 0 : index
    %221 = vector.load %arg3[%c1_148, %c0_149, %c0_150] : memref<4x1x8xf32, #tpu.memory_space<vmem>>, vector<1x1x8xf32>
    %222 = vector.shape_cast %221 : vector<1x1x8xf32> to vector<1x8xf32>
    %223 = vector.broadcast %222 : vector<1x8xf32> to vector<8x8xf32>
    %224 = arith.addf %220, %223 : vector<8x8xf32>
    %c1_151 = arith.constant 1 : index
    %c0_152 = arith.constant 0 : index
    %c0_153 = arith.constant 0 : index
    %225 = vector.load %arg4[%c1_151, %c0_152, %c0_153] : memref<4x32x8xbf16, #tpu.memory_space<vmem>>, vector<1x32x8xbf16>
    %226 = vector.shape_cast %225 : vector<1x32x8xbf16> to vector<32x8xbf16>
    %cst_154 = arith.constant dense<0.000000e+00> : vector<8x8xf32>
    %227 = tpu.matmul %173, %226, %cst_154 {dimension_numbers = #tpu.dot_dimension_numbers<[1], [0], [0], [1], [0, 0, 1, 1], [], []>} : vector<8x32xbf16>, vector<32x8xbf16>, vector<8x8xf32> -> vector<8x8xf32>
    %c1_155 = arith.constant 1 : index
    %c0_156 = arith.constant 0 : index
    %c0_157 = arith.constant 0 : index
    %228 = vector.load %arg5[%c1_155, %c0_156, %c0_157] : memref<4x1x8xf32, #tpu.memory_space<vmem>>, vector<1x1x8xf32>
    %229 = vector.shape_cast %228 : vector<1x1x8xf32> to vector<1x8xf32>
    %230 = vector.broadcast %229 : vector<1x8xf32> to vector<8x8xf32>
    %231 = arith.addf %227, %230 : vector<8x8xf32>
    %c1_158 = arith.constant 1 : index
    %c0_159 = arith.constant 0 : index
    %c0_160 = arith.constant 0 : index
    %232 = vector.load %arg6[%c1_158, %c0_159, %c0_160] : memref<4x32x8xbf16, #tpu.memory_space<vmem>>, vector<1x32x8xbf16>
    %233 = vector.shape_cast %232 : vector<1x32x8xbf16> to vector<32x8xbf16>
    %cst_161 = arith.constant dense<0.000000e+00> : vector<8x8xf32>
    %234 = tpu.matmul %173, %233, %cst_161 {dimension_numbers = #tpu.dot_dimension_numbers<[1], [0], [0], [1], [0, 0, 1, 1], [], []>} : vector<8x32xbf16>, vector<32x8xbf16>, vector<8x8xf32> -> vector<8x8xf32>
    %c1_162 = arith.constant 1 : index
    %c0_163 = arith.constant 0 : index
    %c0_164 = arith.constant 0 : index
    %235 = vector.load %arg7[%c1_162, %c0_163, %c0_164] : memref<4x1x8xf32, #tpu.memory_space<vmem>>, vector<1x1x8xf32>
    %236 = vector.shape_cast %235 : vector<1x1x8xf32> to vector<1x8xf32>
    %237 = vector.broadcast %236 : vector<1x8xf32> to vector<8x8xf32>
    %238 = arith.addf %234, %237 : vector<8x8xf32>
    %239 = arith.truncf %224 : vector<8x8xf32> to vector<8x8xbf16>
    %240 = arith.truncf %231 : vector<8x8xf32> to vector<8x8xbf16>
    %241 = arith.truncf %238 : vector<8x8xf32> to vector<8x8xbf16>
    %cst_165 = arith.constant dense<0.000000e+00> : vector<8x8xf32>
    %242 = tpu.matmul %239, %240, %cst_165 {dimension_numbers = #tpu.dot_dimension_numbers<[1], [1], [0], [0], [0, 0, 1, 0], [], []>} : vector<8x8xbf16>, vector<8x8xbf16>, vector<8x8xf32> -> vector<8x8xf32>
    %243 = vector.broadcast %175 : vector<1x8xf32> to vector<8x8xf32>
    %244 = arith.addf %242, %243 : vector<8x8xf32>
    %cst_166 = arith.constant dense<0xFF800000> : vector<8xf32>
    %245 = vector.multi_reduction <maximumf>, %244, %cst_166 [1] : vector<8x8xf32> to vector<8xf32>
    %246 = vector.shape_cast %245 : vector<8xf32> to vector<8x1xf32>
    %247 = vector.broadcast %246 : vector<8x1xf32> to vector<8x8xf32>
    %248 = arith.subf %244, %247 : vector<8x8xf32>
    %249 = math.exp %248 : vector<8x8xf32>
    %cst_167 = arith.constant dense<0.000000e+00> : vector<8xf32>
    %250 = vector.multi_reduction <add>, %249, %cst_167 [1] : vector<8x8xf32> to vector<8xf32>
    %251 = vector.shape_cast %250 : vector<8xf32> to vector<8x1xf32>
    %252 = arith.truncf %249 : vector<8x8xf32> to vector<8x8xbf16>
    %cst_168 = arith.constant dense<0.000000e+00> : vector<8x8xf32>
    %253 = tpu.matmul %252, %241, %cst_168 {dimension_numbers = #tpu.dot_dimension_numbers<[1], [0], [0], [1], [0, 0, 1, 1], [], []>} : vector<8x8xbf16>, vector<8x8xbf16>, vector<8x8xf32> -> vector<8x8xf32>
    %254 = tpu.reciprocal %251 {approx = true} : vector<8x1xf32> -> vector<8x1xf32>
    %255 = vector.broadcast %254 : vector<8x1xf32> to vector<8x8xf32>
    %256 = arith.mulf %253, %255 : vector<8x8xf32>
    %c1_169 = arith.constant 1 : index
    %c0_170 = arith.constant 0 : index
    %c8_171 = arith.constant 8 : index
    %257 = vector.load %arg9[%c1_169, %c0_170, %c8_171] : memref<2x8x32xf32, #tpu.memory_space<vmem>>, vector<1x8x8xf32>
    %258 = vector.shape_cast %257 : vector<1x8x8xf32> to vector<8x8xf32>
    %259 = vector.shape_cast %256 : vector<8x8xf32> to vector<1x8x8xf32>
    tpu.vector_store %arg9[%c1_169, %c0_170, %c8_171], %259 {strides = array<i32>} : memref<2x8x32xf32, #tpu.memory_space<vmem>>, vector<1x8x8xf32>,
    %c2_172 = arith.constant 2 : index
    %c0_173 = arith.constant 0 : index
    %c0_174 = arith.constant 0 : index
    %260 = vector.load %arg2[%c2_172, %c0_173, %c0_174] : memref<4x32x8xbf16, #tpu.memory_space<vmem>>, vector<1x32x8xbf16>
    %261 = vector.shape_cast %260 : vector<1x32x8xbf16> to vector<32x8xbf16>
    %cst_175 = arith.constant dense<0.000000e+00> : vector<8x8xf32>
    %262 = tpu.matmul %173, %261, %cst_175 {dimension_numbers = #tpu.dot_dimension_numbers<[1], [0], [0], [1], [0, 0, 1, 1], [], []>} : vector<8x32xbf16>, vector<32x8xbf16>, vector<8x8xf32> -> vector<8x8xf32>
    %c2_176 = arith.constant 2 : index
    %c0_177 = arith.constant 0 : index
    %c0_178 = arith.constant 0 : index
    %263 = vector.load %arg3[%c2_176, %c0_177, %c0_178] : memref<4x1x8xf32, #tpu.memory_space<vmem>>, vector<1x1x8xf32>
    %264 = vector.shape_cast %263 : vector<1x1x8xf32> to vector<1x8xf32>
    %265 = vector.broadcast %264 : vector<1x8xf32> to vector<8x8xf32>
    %266 = arith.addf %262, %265 : vector<8x8xf32>
    %c2_179 = arith.constant 2 : index
    %c0_180 = arith.constant 0 : index
    %c0_181 = arith.constant 0 : index
    %267 = vector.load %arg4[%c2_179, %c0_180, %c0_181] : memref<4x32x8xbf16, #tpu.memory_space<vmem>>, vector<1x32x8xbf16>
    %268 = vector.shape_cast %267 : vector<1x32x8xbf16> to vector<32x8xbf16>
    %cst_182 = arith.constant dense<0.000000e+00> : vector<8x8xf32>
    %269 = tpu.matmul %173, %268, %cst_182 {dimension_numbers = #tpu.dot_dimension_numbers<[1], [0], [0], [1], [0, 0, 1, 1], [], []>} : vector<8x32xbf16>, vector<32x8xbf16>, vector<8x8xf32> -> vector<8x8xf32>
    %c2_183 = arith.constant 2 : index
    %c0_184 = arith.constant 0 : index
    %c0_185 = arith.constant 0 : index
    %270 = vector.load %arg5[%c2_183, %c0_184, %c0_185] : memref<4x1x8xf32, #tpu.memory_space<vmem>>, vector<1x1x8xf32>
    %271 = vector.shape_cast %270 : vector<1x1x8xf32> to vector<1x8xf32>
    %272 = vector.broadcast %271 : vector<1x8xf32> to vector<8x8xf32>
    %273 = arith.addf %269, %272 : vector<8x8xf32>
    %c2_186 = arith.constant 2 : index
    %c0_187 = arith.constant 0 : index
    %c0_188 = arith.constant 0 : index
    %274 = vector.load %arg6[%c2_186, %c0_187, %c0_188] : memref<4x32x8xbf16, #tpu.memory_space<vmem>>, vector<1x32x8xbf16>
    %275 = vector.shape_cast %274 : vector<1x32x8xbf16> to vector<32x8xbf16>
    %cst_189 = arith.constant dense<0.000000e+00> : vector<8x8xf32>
    %276 = tpu.matmul %173, %275, %cst_189 {dimension_numbers = #tpu.dot_dimension_numbers<[1], [0], [0], [1], [0, 0, 1, 1], [], []>} : vector<8x32xbf16>, vector<32x8xbf16>, vector<8x8xf32> -> vector<8x8xf32>
    %c2_190 = arith.constant 2 : index
    %c0_191 = arith.constant 0 : index
    %c0_192 = arith.constant 0 : index
    %277 = vector.load %arg7[%c2_190, %c0_191, %c0_192] : memref<4x1x8xf32, #tpu.memory_space<vmem>>, vector<1x1x8xf32>
    %278 = vector.shape_cast %277 : vector<1x1x8xf32> to vector<1x8xf32>
    %279 = vector.broadcast %278 : vector<1x8xf32> to vector<8x8xf32>
    %280 = arith.addf %276, %279 : vector<8x8xf32>
    %281 = arith.truncf %266 : vector<8x8xf32> to vector<8x8xbf16>
    %282 = arith.truncf %273 : vector<8x8xf32> to vector<8x8xbf16>
    %283 = arith.truncf %280 : vector<8x8xf32> to vector<8x8xbf16>
    %cst_193 = arith.constant dense<0.000000e+00> : vector<8x8xf32>
    %284 = tpu.matmul %281, %282, %cst_193 {dimension_numbers = #tpu.dot_dimension_numbers<[1], [1], [0], [0], [0, 0, 1, 0], [], []>} : vector<8x8xbf16>, vector<8x8xbf16>, vector<8x8xf32> -> vector<8x8xf32>
    %285 = vector.broadcast %175 : vector<1x8xf32> to vector<8x8xf32>
    %286 = arith.addf %284, %285 : vector<8x8xf32>
    %cst_194 = arith.constant dense<0xFF800000> : vector<8xf32>
    %287 = vector.multi_reduction <maximumf>, %286, %cst_194 [1] : vector<8x8xf32> to vector<8xf32>
    %288 = vector.shape_cast %287 : vector<8xf32> to vector<8x1xf32>
    %289 = vector.broadcast %288 : vector<8x1xf32> to vector<8x8xf32>
    %290 = arith.subf %286, %289 : vector<8x8xf32>
    %291 = math.exp %290 : vector<8x8xf32>
    %cst_195 = arith.constant dense<0.000000e+00> : vector<8xf32>
    %292 = vector.multi_reduction <add>, %291, %cst_195 [1] : vector<8x8xf32> to vector<8xf32>
    %293 = vector.shape_cast %292 : vector<8xf32> to vector<8x1xf32>
    %294 = arith.truncf %291 : vector<8x8xf32> to vector<8x8xbf16>
    %cst_196 = arith.constant dense<0.000000e+00> : vector<8x8xf32>
    %295 = tpu.matmul %294, %283, %cst_196 {dimension_numbers = #tpu.dot_dimension_numbers<[1], [0], [0], [1], [0, 0, 1, 1], [], []>} : vector<8x8xbf16>, vector<8x8xbf16>, vector<8x8xf32> -> vector<8x8xf32>
    %296 = tpu.reciprocal %293 {approx = true} : vector<8x1xf32> -> vector<8x1xf32>
    %297 = vector.broadcast %296 : vector<8x1xf32> to vector<8x8xf32>
    %298 = arith.mulf %295, %297 : vector<8x8xf32>
    %c1_197 = arith.constant 1 : index
    %c0_198 = arith.constant 0 : index
    %c16_199 = arith.constant 16 : index
    %299 = vector.load %arg9[%c1_197, %c0_198, %c16_199] : memref<2x8x32xf32, #tpu.memory_space<vmem>>, vector<1x8x8xf32>
    %300 = vector.shape_cast %299 : vector<1x8x8xf32> to vector<8x8xf32>
    %301 = vector.shape_cast %298 : vector<8x8xf32> to vector<1x8x8xf32>
    tpu.vector_store %arg9[%c1_197, %c0_198, %c16_199], %301 {strides = array<i32>} : memref<2x8x32xf32, #tpu.memory_space<vmem>>, vector<1x8x8xf32>,
    %c3_200 = arith.constant 3 : index
    %c0_201 = arith.constant 0 : index
    %c0_202 = arith.constant 0 : index
    %302 = vector.load %arg2[%c3_200, %c0_201, %c0_202] : memref<4x32x8xbf16, #tpu.memory_space<vmem>>, vector<1x32x8xbf16>
    %303 = vector.shape_cast %302 : vector<1x32x8xbf16> to vector<32x8xbf16>
    %cst_203 = arith.constant dense<0.000000e+00> : vector<8x8xf32>
    %304 = tpu.matmul %173, %303, %cst_203 {dimension_numbers = #tpu.dot_dimension_numbers<[1], [0], [0], [1], [0, 0, 1, 1], [], []>} : vector<8x32xbf16>, vector<32x8xbf16>, vector<8x8xf32> -> vector<8x8xf32>
    %c3_204 = arith.constant 3 : index
    %c0_205 = arith.constant 0 : index
    %c0_206 = arith.constant 0 : index
    %305 = vector.load %arg3[%c3_204, %c0_205, %c0_206] : memref<4x1x8xf32, #tpu.memory_space<vmem>>, vector<1x1x8xf32>
    %306 = vector.shape_cast %305 : vector<1x1x8xf32> to vector<1x8xf32>
    %307 = vector.broadcast %306 : vector<1x8xf32> to vector<8x8xf32>
    %308 = arith.addf %304, %307 : vector<8x8xf32>
    %c3_207 = arith.constant 3 : index
    %c0_208 = arith.constant 0 : index
    %c0_209 = arith.constant 0 : index
    %309 = vector.load %arg4[%c3_207, %c0_208, %c0_209] : memref<4x32x8xbf16, #tpu.memory_space<vmem>>, vector<1x32x8xbf16>
    %310 = vector.shape_cast %309 : vector<1x32x8xbf16> to vector<32x8xbf16>
    %cst_210 = arith.constant dense<0.000000e+00> : vector<8x8xf32>
    %311 = tpu.matmul %173, %310, %cst_210 {dimension_numbers = #tpu.dot_dimension_numbers<[1], [0], [0], [1], [0, 0, 1, 1], [], []>} : vector<8x32xbf16>, vector<32x8xbf16>, vector<8x8xf32> -> vector<8x8xf32>
    %c3_211 = arith.constant 3 : index
    %c0_212 = arith.constant 0 : index
    %c0_213 = arith.constant 0 : index
    %312 = vector.load %arg5[%c3_211, %c0_212, %c0_213] : memref<4x1x8xf32, #tpu.memory_space<vmem>>, vector<1x1x8xf32>
    %313 = vector.shape_cast %312 : vector<1x1x8xf32> to vector<1x8xf32>
    %314 = vector.broadcast %313 : vector<1x8xf32> to vector<8x8xf32>
    %315 = arith.addf %311, %314 : vector<8x8xf32>
    %c3_214 = arith.constant 3 : index
    %c0_215 = arith.constant 0 : index
    %c0_216 = arith.constant 0 : index
    %316 = vector.load %arg6[%c3_214, %c0_215, %c0_216] : memref<4x32x8xbf16, #tpu.memory_space<vmem>>, vector<1x32x8xbf16>
    %317 = vector.shape_cast %316 : vector<1x32x8xbf16> to vector<32x8xbf16>
    %cst_217 = arith.constant dense<0.000000e+00> : vector<8x8xf32>
    %318 = tpu.matmul %173, %317, %cst_217 {dimension_numbers = #tpu.dot_dimension_numbers<[1], [0], [0], [1], [0, 0, 1, 1], [], []>} : vector<8x32xbf16>, vector<32x8xbf16>, vector<8x8xf32> -> vector<8x8xf32>
    %c3_218 = arith.constant 3 : index
    %c0_219 = arith.constant 0 : index
    %c0_220 = arith.constant 0 : index
    %319 = vector.load %arg7[%c3_218, %c0_219, %c0_220] : memref<4x1x8xf32, #tpu.memory_space<vmem>>, vector<1x1x8xf32>
    %320 = vector.shape_cast %319 : vector<1x1x8xf32> to vector<1x8xf32>
    %321 = vector.broadcast %320 : vector<1x8xf32> to vector<8x8xf32>
    %322 = arith.addf %318, %321 : vector<8x8xf32>
    %323 = arith.truncf %308 : vector<8x8xf32> to vector<8x8xbf16>
    %324 = arith.truncf %315 : vector<8x8xf32> to vector<8x8xbf16>
    %325 = arith.truncf %322 : vector<8x8xf32> to vector<8x8xbf16>
    %cst_221 = arith.constant dense<0.000000e+00> : vector<8x8xf32>
    %326 = tpu.matmul %323, %324, %cst_221 {dimension_numbers = #tpu.dot_dimension_numbers<[1], [1], [0], [0], [0, 0, 1, 0], [], []>} : vector<8x8xbf16>, vector<8x8xbf16>, vector<8x8xf32> -> vector<8x8xf32>
    %327 = vector.broadcast %175 : vector<1x8xf32> to vector<8x8xf32>
    %328 = arith.addf %326, %327 : vector<8x8xf32>
    %cst_222 = arith.constant dense<0xFF800000> : vector<8xf32>
    %329 = vector.multi_reduction <maximumf>, %328, %cst_222 [1] : vector<8x8xf32> to vector<8xf32>
    %330 = vector.shape_cast %329 : vector<8xf32> to vector<8x1xf32>
    %331 = vector.broadcast %330 : vector<8x1xf32> to vector<8x8xf32>
    %332 = arith.subf %328, %331 : vector<8x8xf32>
    %333 = math.exp %332 : vector<8x8xf32>
    %cst_223 = arith.constant dense<0.000000e+00> : vector<8xf32>
    %334 = vector.multi_reduction <add>, %333, %cst_223 [1] : vector<8x8xf32> to vector<8xf32>
    %335 = vector.shape_cast %334 : vector<8xf32> to vector<8x1xf32>
    %336 = arith.truncf %333 : vector<8x8xf32> to vector<8x8xbf16>
    %cst_224 = arith.constant dense<0.000000e+00> : vector<8x8xf32>
    %337 = tpu.matmul %336, %325, %cst_224 {dimension_numbers = #tpu.dot_dimension_numbers<[1], [0], [0], [1], [0, 0, 1, 1], [], []>} : vector<8x8xbf16>, vector<8x8xbf16>, vector<8x8xf32> -> vector<8x8xf32>
    %338 = tpu.reciprocal %335 {approx = true} : vector<8x1xf32> -> vector<8x1xf32>
    %339 = vector.broadcast %338 : vector<8x1xf32> to vector<8x8xf32>
    %340 = arith.mulf %337, %339 : vector<8x8xf32>
    %c1_225 = arith.constant 1 : index
    %c0_226 = arith.constant 0 : index
    %c24_227 = arith.constant 24 : index
    %341 = vector.load %arg9[%c1_225, %c0_226, %c24_227] : memref<2x8x32xf32, #tpu.memory_space<vmem>>, vector<1x8x8xf32>
    %342 = vector.shape_cast %341 : vector<1x8x8xf32> to vector<8x8xf32>
    %343 = vector.shape_cast %340 : vector<8x8xf32> to vector<1x8x8xf32>
    tpu.vector_store %arg9[%c1_225, %c0_226, %c24_227], %343 {strides = array<i32>} : memref<2x8x32xf32, #tpu.memory_space<vmem>>, vector<1x8x8xf32>,
    return
  }
  func.func @transform_0(%arg0: i32) -> (i32, i32, i32) {
    %c0_i32 = arith.constant 0 : i32
    %c0_i32_0 = arith.constant 0 : i32
    %c0_i32_1 = arith.constant 0 : i32
    return %arg0, %c0_i32, %c0_i32_0 : i32, i32, i32
  }
  func.func @transform_1(%arg0: i32) -> (i32, i32, i32) {
    %c0_i32 = arith.constant 0 : i32
    %c0_i32_0 = arith.constant 0 : i32
    %c0_i32_1 = arith.constant 0 : i32
    %c0_i32_2 = arith.constant 0 : i32
    return %c0_i32, %c0_i32_0, %c0_i32_1 : i32, i32, i32
  }
  func.func @transform_2(%arg0: i32) -> (i32, i32, i32) {
    %c0_i32 = arith.constant 0 : i32
    %c0_i32_0 = arith.constant 0 : i32
    %c0_i32_1 = arith.constant 0 : i32
    %c0_i32_2 = arith.constant 0 : i32
    return %c0_i32, %c0_i32_0, %c0_i32_1 : i32, i32, i32
  }
  func.func @transform_3(%arg0: i32) -> (i32, i32, i32) {
    %c0_i32 = arith.constant 0 : i32
    %c0_i32_0 = arith.constant 0 : i32
    %c0_i32_1 = arith.constant 0 : i32
    %c0_i32_2 = arith.constant 0 : i32
    return %c0_i32, %c0_i32_0, %c0_i32_1 : i32, i32, i32
  }
  func.func @transform_4(%arg0: i32) -> (i32, i32, i32) {
    %c0_i32 = arith.constant 0 : i32
    %c0_i32_0 = arith.constant 0 : i32
    %c0_i32_1 = arith.constant 0 : i32
    %c0_i32_2 = arith.constant 0 : i32
    return %c0_i32, %c0_i32_0, %c0_i32_1 : i32, i32, i32
  }
  func.func @transform_5(%arg0: i32) -> (i32, i32, i32) {
    %c0_i32 = arith.constant 0 : i32
    %c0_i32_0 = arith.constant 0 : i32
    %c0_i32_1 = arith.constant 0 : i32
    %c0_i32_2 = arith.constant 0 : i32
    return %c0_i32, %c0_i32_0, %c0_i32_1 : i32, i32, i32
  }
  func.func @transform_6(%arg0: i32) -> (i32, i32, i32) {
    %c0_i32 = arith.constant 0 : i32
    %c0_i32_0 = arith.constant 0 : i32
    %c0_i32_1 = arith.constant 0 : i32
    %c0_i32_2 = arith.constant 0 : i32
    return %c0_i32, %c0_i32_0, %c0_i32_1 : i32, i32, i32
  }
  func.func @transform_7(%arg0: i32) -> (i32, i32, i32) {
    %c0_i32 = arith.constant 0 : i32
    %c0_i32_0 = arith.constant 0 : i32
    %c0_i32_1 = arith.constant 0 : i32
    return %arg0, %c0_i32, %c0_i32_0 : i32, i32, i32
  }
  func.func @transform_8(%arg0: i32) -> (i32, i32, i32) {
    %c0_i32 = arith.constant 0 : i32
    %c0_i32_0 = arith.constant 0 : i32
    %c0_i32_1 = arith.constant 0 : i32
    return %arg0, %c0_i32, %c0_i32_0 : i32, i32, i32
  }
}

</mosaic_0001>

<llo_original>
// kernel: tpu_custom_call.1
$region0: #{tpu_custom_call.1}
  #allocation0 [shape = 'u32[]', space=smem, size = 0x4, offset = 0x4, fixed_abs, tag = 'smem constant byte address 0x4 - core index']
  #allocation1 [shape = 'u32[72,128]{1,0:T(1,128)}', space=vmem, size = 0x9000, scoped, tag = 'internal scratch']
  %s0 = inlined_call_operand.vmem [shape: bf16[2,8,32], index: 0, kind: input, shape index: {}]
  %s1 = inlined_call_operand.vmem [shape: bf16[4,32,8], index: 1, kind: input, shape index: {}]
  %s2 = inlined_call_operand.vmem [shape: f32[4,1,8], index: 2, kind: input, shape index: {}]
  %s3 = inlined_call_operand.vmem [shape: bf16[4,32,8], index: 3, kind: input, shape index: {}]
  %s4 = inlined_call_operand.vmem [shape: f32[4,1,8], index: 4, kind: input, shape index: {}]
  %s5 = inlined_call_operand.vmem [shape: bf16[4,32,8], index: 5, kind: input, shape index: {}]
  %s6 = inlined_call_operand.vmem [shape: f32[4,1,8], index: 6, kind: input, shape index: {}]
  %s7 = inlined_call_operand.vmem [shape: f32[2,1,8], index: 7, kind: input, shape index: {}]
  %s8 = inlined_call_operand.hbm [shape: f32[2,8,32], index: 8, kind: output, shape index: {}]
  %s9 = sld [smem:[#allocation0]]
  $region42: #{tpu_custom_call.1} parent=0
    _
  %s11 = ssub.s32 1, %s9
  %s12 = scalar_select 0, %s11, %s9
  $region1: #{tpu_custom_call.1} parent=0
    #allocation2 [shape = 'u8[8192]{0}', space=vmem, size = 0x2000, scoped, tag = 'output window, operand 0, single buffered']
    #allocation3 [shape = 's32[1]{0}', space=sflag, size = 0x4, scoped, tag = 'scoped memory for tpu_custom_call.1']
    %13 = vsyncpa [#allocation3], 0
    // Predicated region
    $region2: #{tpu_custom_call.1} parent=1 // pred_check
      _
    $region3: #{tpu_custom_call.1} parent=1 // pred_check_branch
      %15 = sbr.rel (0) target = $region5
    $region4: #{tpu_custom_call.1} parent=1 // pred_region
      _
    $region5: #{tpu_custom_call.1} parent=1 // pred_fallthru
      _
    // Predicated region
    $region6: #{tpu_custom_call.1} parent=1 // pred_check
      _
    $region7: #{tpu_custom_call.1} parent=1 // pred_check_branch
      %17 = sbr.rel (0) target = $region9
    $region8: #{tpu_custom_call.1} parent=1 // pred_region
      _
    $region9: #{tpu_custom_call.1} parent=1 // pred_fallthru
      _
    // Predicated region
    $region10: #{tpu_custom_call.1} parent=1 // pred_check
      _
    $region11: #{tpu_custom_call.1} parent=1 // pred_check_branch
      %19 = sbr.rel (0) target = $region13
    $region12: #{tpu_custom_call.1} parent=1 // pred_region
      _
    $region13: #{tpu_custom_call.1} parent=1 // pred_fallthru
      _
    // Predicated region
    $region14: #{tpu_custom_call.1} parent=1 // pred_check
      _
    $region15: #{tpu_custom_call.1} parent=1 // pred_check_branch
      %21 = sbr.rel (0) target = $region17
    $region16: #{tpu_custom_call.1} parent=1 // pred_region
      _
    $region17: #{tpu_custom_call.1} parent=1 // pred_fallthru
      _
    // Predicated region
    $region18: #{tpu_custom_call.1} parent=1 // pred_check
      _
    $region19: #{tpu_custom_call.1} parent=1 // pred_check_branch
      %23 = sbr.rel (0) target = $region21
    $region20: #{tpu_custom_call.1} parent=1 // pred_region
      _
    $region21: #{tpu_custom_call.1} parent=1 // pred_fallthru
      _
    // Predicated region
    $region22: #{tpu_custom_call.1} parent=1 // pred_check
      _
    $region23: #{tpu_custom_call.1} parent=1 // pred_check_branch
      %25 = sbr.rel (0) target = $region25
    $region24: #{tpu_custom_call.1} parent=1 // pred_region
      _
    $region25: #{tpu_custom_call.1} parent=1 // pred_fallthru
      _
    // Predicated region
    $region26: #{tpu_custom_call.1} parent=1 // pred_check
      _
    $region27: #{tpu_custom_call.1} parent=1 // pred_check_branch
      %27 = sbr.rel (0) target = $region29
    $region28: #{tpu_custom_call.1} parent=1 // pred_region
      _
    $region29: #{tpu_custom_call.1} parent=1 // pred_fallthru
      _
    // Predicated region
    $region30: #{tpu_custom_call.1} parent=1 // pred_check
      _
    $region31: #{tpu_custom_call.1} parent=1 // pred_check_branch
      %29 = sbr.rel (0) target = $region33
    $region32: #{tpu_custom_call.1} parent=1 // pred_region
      _
    $region33: #{tpu_custom_call.1} parent=1 // pred_fallthru
      _
    %v31 = vld [vmem:[%s0] sm:$0xf]
    %v32 = vld [vmem:[%s7] sm:$0x1]
    %v33 = vld [vmem:[%s1] sm:$0xf]
    %v34 = vld [vmem:[%s1 + $0x4] sm:$0xf]
    %v35 = vld [vmem:[%s1 + $0x8] sm:$0xf]
    %v36 = vld [vmem:[%s1 + $0xc] sm:$0xf]
    %v37 = vld [vmem:[%s2] sm:$0x1]
    %v39 = vperm.slane %v37, 0
    %v45 = vunpack.c.l.b16 %v33
    %v46 = vunpack.c.l.b16 %v34
    %v47 = vunpack.c.l.b16 %v35
    %v48 = vunpack.c.l.b16 %v36
    %v49 = vpack.c.b16 %v46, %v45
    %v50 = vpack.c.b16 %v48, %v47
    %vm53 = vcmask 261120
    %v55 = vsel %vm53, %v31, 0
    %57 = vmatpush.bf16.msra.mxu0 0
    %58 = vmatpush.bf16.msra.mxu0 0
    %59 = vmatpush.bf16.msra.mxu0 0
    %60 = vmatpush.bf16.msra.mxu0 0
    %61 = vmatpush.bf16.msra.mxu0 0
    %62 = vmatpush.bf16.msra.mxu0 0
    %63 = vmatpush.bf16.msra.mxu0 %v50
    %64 = vmatpush.bf16.msra.mxu0 %v49
    %65 = vmatmul.bf16.gmra.mxu0 %v55
    %v66 = vpop.f32.mrf.mxu0
    %v67 = vadd.f32 %v39, %v66
    %v68 = vpop.f32.mrf.mxu0
    %69 = vdwg.mxu0
    %v70 = vld [vmem:[%s3] sm:$0xf]
    %v71 = vld [vmem:[%s3 + $0x4] sm:$0xf]
    %v72 = vld [vmem:[%s3 + $0x8] sm:$0xf]
    %v73 = vld [vmem:[%s3 + $0xc] sm:$0xf]
    %v74 = vld [vmem:[%s4] sm:$0x1]
    %v76 = vperm.slane %v74, 0
    %v82 = vunpack.c.l.b16 %v70
    %v83 = vunpack.c.l.b16 %v71
    %v84 = vunpack.c.l.b16 %v72
    %v85 = vunpack.c.l.b16 %v73
    %v86 = vpack.c.b16 %v83, %v82
    %v87 = vpack.c.b16 %v85, %v84
    %90 = vmatpush.bf16.msra.mxu0 0
    %91 = vmatpush.bf16.msra.mxu0 0
    %92 = vmatpush.bf16.msra.mxu0 0
    %93 = vmatpush.bf16.msra.mxu0 0
    %94 = vmatpush.bf16.msra.mxu0 0
    %95 = vmatpush.bf16.msra.mxu0 0
    %96 = vmatpush.bf16.msra.mxu0 %v87
    %97 = vmatpush.bf16.msra.mxu0 %v86
    %98 = vmatmul.bf16.gmra.mxu0 %v55
    %v99 = vpop.f32.mrf.mxu0
    %v100 = vadd.f32 %v76, %v99
    %v101 = vpop.f32.mrf.mxu0
    %102 = vdwg.mxu0
    %v103 = vld [vmem:[%s5] sm:$0xf]
    %v104 = vld [vmem:[%s5 + $0x4] sm:$0xf]
    %v105 = vld [vmem:[%s5 + $0x8] sm:$0xf]
    %v106 = vld [vmem:[%s5 + $0xc] sm:$0xf]
    %v107 = vld [vmem:[%s6] sm:$0x1]
    %v109 = vperm.slane %v107, 0
    %v115 = vunpack.c.l.b16 %v103
    %v116 = vunpack.c.l.b16 %v104
    %v117 = vunpack.c.l.b16 %v105
    %v118 = vunpack.c.l.b16 %v106
    %v119 = vpack.c.b16 %v116, %v115
    %v120 = vpack.c.b16 %v118, %v117
    %123 = vmatpush.bf16.msra.mxu0 0
    %124 = vmatpush.bf16.msra.mxu0 0
    %125 = vmatpush.bf16.msra.mxu0 0
    %126 = vmatpush.bf16.msra.mxu0 0
    %127 = vmatpush.bf16.msra.mxu0 0
    %128 = vmatpush.bf16.msra.mxu0 0
    %129 = vmatpush.bf16.msra.mxu0 %v120
    %130 = vmatpush.bf16.msra.mxu0 %v119
    %131 = vmatmul.bf16.gmra.mxu0 %v55
    %v132 = vpop.f32.mrf.mxu0
    %v133 = vadd.f32 %v109, %v132
    %v134 = vpop.f32.mrf.mxu0
    %135 = vdwg.mxu0
    %v136 = vpack.c.bf16 %v67, %v67
    %v137 = vpack.c.bf16 %v100, %v100
    %v138 = vpack.c.bf16 %v133, %v133
    %v140 = vperm.slane %v32, 0
    %vm142 = vcmask 64512
    %v144 = vsel %vm142, %v136, 0
    %v147 = vsel %vm142, %v137, 0
    %149 = vmatpush.bf16.xpose.msra.mxu0 0
    %150 = vmatpush.bf16.xpose.msra.mxu0 0
    %151 = vmatpush.bf16.xpose.msra.mxu0 0
    %152 = vmatpush.bf16.xpose.msra.mxu0 0
    %153 = vmatpush.bf16.xpose.msra.mxu0 0
    %154 = vmatpush.bf16.xpose.msra.mxu0 0
    %155 = vmatpush.bf16.xpose.msra.mxu0 0
    %156 = vmatpush.bf16.xpose.msra.mxu0 %v147
    %157 = vmatmul.bf16.gmra.mxu0 %v144
    %v158 = vpop.f32.mrf.mxu0
    %v159 = vadd.f32 %v140, %v158
    %v160 = vpop.f32.mrf.mxu0
    %161 = vdwg.mxu0
    %v162 = vsel %vm142, %v159, -inf
    %163 = vmax.xlane.f32.xlu0 %v162
    %v164 = vpop.xlane.xlu0 %163
    %v165 = vsub.f32 %v159, %v164
    %v166 = vmul.f32 %v165, 1.442695
    %v167 = vpow.pop %v166
    %v168 = vsel %vm142, %v167, 0.0
    %169 = vadd.xlane.f32.xlu0 %v168
    %v170 = vpop.xlane.xlu0 %169
    %v171 = vpack.c.bf16 %v167, %v167
    %v173 = vsel %vm142, %v171, 0
    %vm175 = vcmask 1043456
    %v177 = vsel %vm175, %v138, 0
    %179 = vmatpush.bf16.msra.mxu0 0
    %180 = vmatpush.bf16.msra.mxu0 0
    %181 = vmatpush.bf16.msra.mxu0 0
    %182 = vmatpush.bf16.msra.mxu0 0
    %183 = vmatpush.bf16.msra.mxu0 0
    %184 = vmatpush.bf16.msra.mxu0 0
    %185 = vmatpush.bf16.msra.mxu0 0
    %186 = vmatpush.bf16.msra.mxu0 %v177
    %187 = vmatmul.bf16.gmra.mxu0 %v173
    %v188 = vpop.f32.mrf.mxu0
    %v189 = vadd.f32 0.0, %v188
    %v190 = vpop.f32.mrf.mxu0
    %191 = vdwg.mxu0
    %v192 = vrcp.pop %v170
    %v193 = vmul.f32 %v189, %v192
    %194 = vst.msk [vmem:[#allocation2] sm:$0xff] %vm142, %v193
    %s195 = scalar_lea.vmem %s1, 16
    %v196 = vld [vmem:[%s195] sm:$0xf]
    %v197 = vld [vmem:[%s195 + $0x4] sm:$0xf]
    %v198 = vld [vmem:[%s195 + $0x8] sm:$0xf]
    %v199 = vld [vmem:[%s195 + $0xc] sm:$0xf]
    %s200 = scalar_lea.vmem %s2, 1
    %v201 = vld [vmem:[%s200] sm:$0x1]
    %v203 = vperm.slane %v201, 0
    %v209 = vunpack.c.l.b16 %v196
    %v210 = vunpack.c.l.b16 %v197
    %v211 = vunpack.c.l.b16 %v198
    %v212 = vunpack.c.l.b16 %v199
    %v213 = vpack.c.b16 %v210, %v209
    %v214 = vpack.c.b16 %v212, %v211
    %217 = vmatpush.bf16.msra.mxu0 0
    %218 = vmatpush.bf16.msra.mxu0 0
    %219 = vmatpush.bf16.msra.mxu0 0
    %220 = vmatpush.bf16.msra.mxu0 0
    %221 = vmatpush.bf16.msra.mxu0 0
    %222 = vmatpush.bf16.msra.mxu0 0
    %223 = vmatpush.bf16.msra.mxu0 %v214
    %224 = vmatpush.bf16.msra.mxu0 %v213
    %225 = vmatmul.bf16.gmra.mxu0 %v55
    %v226 = vpop.f32.mrf.mxu0
    %v227 = vadd.f32 %v203, %v226
    %v228 = vpop.f32.mrf.mxu0
    %229 = vdwg.mxu0
    %s230 = scalar_lea.vmem %s3, 16
    %v231 = vld [vmem:[%s230] sm:$0xf]
    %v232 = vld [vmem:[%s230 + $0x4] sm:$0xf]
    %v233 = vld [vmem:[%s230 + $0x8] sm:$0xf]
    %v234 = vld [vmem:[%s230 + $0xc] sm:$0xf]
    %s235 = scalar_lea.vmem %s4, 1
    %v236 = vld [vmem:[%s235] sm:$0x1]
    %v238 = vperm.slane %v236, 0
    %v244 = vunpack.c.l.b16 %v231
    %v245 = vunpack.c.l.b16 %v232
    %v246 = vunpack.c.l.b16 %v233
    %v247 = vunpack.c.l.b16 %v234
    %v248 = vpack.c.b16 %v245, %v244
    %v249 = vpack.c.b16 %v247, %v246
    %252 = vmatpush.bf16.msra.mxu0 0
    %253 = vmatpush.bf16.msra.mxu0 0
    %254 = vmatpush.bf16.msra.mxu0 0
    %255 = vmatpush.bf16.msra.mxu0 0
    %256 = vmatpush.bf16.msra.mxu0 0
    %257 = vmatpush.bf16.msra.mxu0 0
    %258 = vmatpush.bf16.msra.mxu0 %v249
    %259 = vmatpush.bf16.msra.mxu0 %v248
    %260 = vmatmul.bf16.gmra.mxu0 %v55
    %v261 = vpop.f32.mrf.mxu0
    %v262 = vadd.f32 %v238, %v261
    %v263 = vpop.f32.mrf.mxu0
    %264 = vdwg.mxu0
    %s265 = scalar_lea.vmem %s5, 16
    %v266 = vld [vmem:[%s265] sm:$0xf]
    %v267 = vld [vmem:[%s265 + $0x4] sm:$0xf]
    %v268 = vld [vmem:[%s265 + $0x8] sm:$0xf]
    %v269 = vld [vmem:[%s265 + $0xc] sm:$0xf]
    %s270 = scalar_lea.vmem %s6, 1
    %v271 = vld [vmem:[%s270] sm:$0x1]
    %v273 = vperm.slane %v271, 0
    %v279 = vunpack.c.l.b16 %v266
    %v280 = vunpack.c.l.b16 %v267
    %v281 = vunpack.c.l.b16 %v268
    %v282 = vunpack.c.l.b16 %v269
    %v283 = vpack.c.b16 %v280, %v279
    %v284 = vpack.c.b16 %v282, %v281
    %287 = vmatpush.bf16.msra.mxu0 0
    %288 = vmatpush.bf16.msra.mxu0 0
    %289 = vmatpush.bf16.msra.mxu0 0
    %290 = vmatpush.bf16.msra.mxu0 0
    %291 = vmatpush.bf16.msra.mxu0 0
    %292 = vmatpush.bf16.msra.mxu0 0
    %293 = vmatpush.bf16.msra.mxu0 %v284
    %294 = vmatpush.bf16.msra.mxu0 %v283
    %295 = vmatmul.bf16.gmra.mxu0 %v55
    %v296 = vpop.f32.mrf.mxu0
    %v297 = vadd.f32 %v273, %v296
    %v298 = vpop.f32.mrf.mxu0
    %299 = vdwg.mxu0
    %v300 = vpack.c.bf16 %v227, %v227
    %v301 = vpack.c.bf16 %v262, %v262
    %v302 = vpack.c.bf16 %v297, %v297
    %v304 = vsel %vm142, %v300, 0
    %v307 = vsel %vm142, %v301, 0
    %309 = vmatpush.bf16.xpose.msra.mxu0 0
    %310 = vmatpush.bf16.xpose.msra.mxu0 0
    %311 = vmatpush.bf16.xpose.msra.mxu0 0
    %312 = vmatpush.bf16.xpose.msra.mxu0 0
    %313 = vmatpush.bf16.xpose.msra.mxu0 0
    %314 = vmatpush.bf16.xpose.msra.mxu0 0
    %315 = vmatpush.bf16.xpose.msra.mxu0 0
    %316 = vmatpush.bf16.xpose.msra.mxu0 %v307
    %317 = vmatmul.bf16.gmra.mxu0 %v304
    %v318 = vpop.f32.mrf.mxu0
    %v319 = vadd.f32 %v140, %v318
    %v320 = vpop.f32.mrf.mxu0
    %321 = vdwg.mxu0
    %v322 = vsel %vm142, %v319, -inf
    %323 = vmax.xlane.f32.xlu0 %v322
    %v324 = vpop.xlane.xlu0 %323
    %v325 = vsub.f32 %v319, %v324
    %v326 = vmul.f32 %v325, 1.442695
    %v327 = vpow.pop %v326
    %v328 = vsel %vm142, %v327, 0.0
    %329 = vadd.xlane.f32.xlu0 %v328
    %v330 = vpop.xlane.xlu0 %329
    %v331 = vpack.c.bf16 %v327, %v327
    %v333 = vsel %vm142, %v331, 0
    %v336 = vsel %vm175, %v302, 0
    %338 = vmatpush.bf16.msra.mxu0 0
    %339 = vmatpush.bf16.msra.mxu0 0
    %340 = vmatpush.bf16.msra.mxu0 0
    %341 = vmatpush.bf16.msra.mxu0 0
    %342 = vmatpush.bf16.msra.mxu0 0
    %343 = vmatpush.bf16.msra.mxu0 0
    %344 = vmatpush.bf16.msra.mxu0 0
    %345 = vmatpush.bf16.msra.mxu0 %v336
    %346 = vmatmul.bf16.gmra.mxu0 %v333
    %v347 = vpop.f32.mrf.mxu0
    %v348 = vadd.f32 0.0, %v347
    %v349 = vpop.f32.mrf.mxu0
    %350 = vdwg.mxu0
    %v351 = vrcp.pop %v330
    %v352 = vmul.f32 %v348, %v351
    %354 = vrot.lane.b32.xlu0 %v352, 8
    %v355 = vpop.permute.xlu0 %354
    %vm357 = vcmask 130112
    %358 = vst.msk [vmem:[#allocation2] sm:$0xff] %vm357, %v355
    %s359 = scalar_lea.vmem %s1, 32
    %v360 = vld [vmem:[%s359] sm:$0xf]
    %v361 = vld [vmem:[%s359 + $0x4] sm:$0xf]
    %v362 = vld [vmem:[%s359 + $0x8] sm:$0xf]
    %v363 = vld [vmem:[%s359 + $0xc] sm:$0xf]
    %s364 = scalar_lea.vmem %s2, 2
    %v365 = vld [vmem:[%s364] sm:$0x1]
    %v367 = vperm.slane %v365, 0
    %v373 = vunpack.c.l.b16 %v360
    %v374 = vunpack.c.l.b16 %v361
    %v375 = vunpack.c.l.b16 %v362
    %v376 = vunpack.c.l.b16 %v363
    %v377 = vpack.c.b16 %v374, %v373
    %v378 = vpack.c.b16 %v376, %v375
    %381 = vmatpush.bf16.msra.mxu0 0
    %382 = vmatpush.bf16.msra.mxu0 0
    %383 = vmatpush.bf16.msra.mxu0 0
    %384 = vmatpush.bf16.msra.mxu0 0
    %385 = vmatpush.bf16.msra.mxu0 0
    %386 = vmatpush.bf16.msra.mxu0 0
    %387 = vmatpush.bf16.msra.mxu0 %v378
    %388 = vmatpush.bf16.msra.mxu0 %v377
    %389 = vmatmul.bf16.gmra.mxu0 %v55
    %v390 = vpop.f32.mrf.mxu0
    %v391 = vadd.f32 %v367, %v390
    %v392 = vpop.f32.mrf.mxu0
    %393 = vdwg.mxu0
    %s394 = scalar_lea.vmem %s3, 32
    %v395 = vld [vmem:[%s394] sm:$0xf]
    %v396 = vld [vmem:[%s394 + $0x4] sm:$0xf]
    %v397 = vld [vmem:[%s394 + $0x8] sm:$0xf]
    %v398 = vld [vmem:[%s394 + $0xc] sm:$0xf]
    %s399 = scalar_lea.vmem %s4, 2
    %v400 = vld [vmem:[%s399] sm:$0x1]
    %v402 = vperm.slane %v400, 0
    %v408 = vunpack.c.l.b16 %v395
    %v409 = vunpack.c.l.b16 %v396
    %v410 = vunpack.c.l.b16 %v397
    %v411 = vunpack.c.l.b16 %v398
    %v412 = vpack.c.b16 %v409, %v408
    %v413 = vpack.c.b16 %v411, %v410
    %416 = vmatpush.bf16.msra.mxu0 0
    %417 = vmatpush.bf16.msra.mxu0 0
    %418 = vmatpush.bf16.msra.mxu0 0
    %419 = vmatpush.bf16.msra.mxu0 0
    %420 = vmatpush.bf16.msra.mxu0 0
    %421 = vmatpush.bf16.msra.mxu0 0
    %422 = vmatpush.bf16.msra.mxu0 %v413
    %423 = vmatpush.bf16.msra.mxu0 %v412
    %424 = vmatmul.bf16.gmra.mxu0 %v55
    %v425 = vpop.f32.mrf.mxu0
    %v426 = vadd.f32 %v402, %v425
    %v427 = vpop.f32.mrf.mxu0
    %428 = vdwg.mxu0
    %s429 = scalar_lea.vmem %s5, 32
    %v430 = vld [vmem:[%s429] sm:$0xf]
    %v431 = vld [vmem:[%s429 + $0x4] sm:$0xf]
    %v432 = vld [vmem:[%s429 + $0x8] sm:$0xf]
    %v433 = vld [vmem:[%s429 + $0xc] sm:$0xf]
    %s434 = scalar_lea.vmem %s6, 2
    %v435 = vld [vmem:[%s434] sm:$0x1]
    %v437 = vperm.slane %v435, 0
    %v443 = vunpack.c.l.b16 %v430
    %v444 = vunpack.c.l.b16 %v431
    %v445 = vunpack.c.l.b16 %v432
    %v446 = vunpack.c.l.b16 %v433
    %v447 = vpack.c.b16 %v444, %v443
    %v448 = vpack.c.b16 %v446, %v445
    %451 = vmatpush.bf16.msra.mxu0 0
    %452 = vmatpush.bf16.msra.mxu0 0
    %453 = vmatpush.bf16.msra.mxu0 0
    %454 = vmatpush.bf16.msra.mxu0 0
    %455 = vmatpush.bf16.msra.mxu0 0
    %456 = vmatpush.bf16.msra.mxu0 0
    %457 = vmatpush.bf16.msra.mxu0 %v448
    %458 = vmatpush.bf16.msra.mxu0 %v447
    %459 = vmatmul.bf16.gmra.mxu0 %v55
    %v460 = vpop.f32.mrf.mxu0
    %v461 = vadd.f32 %v437, %v460
    %v462 = vpop.f32.mrf.mxu0
    %463 = vdwg.mxu0
    %v464 = vpack.c.bf16 %v391, %v391
    %v465 = vpack.c.bf16 %v426, %v426
    %v466 = vpack.c.bf16 %v461, %v461
    %v468 = vsel %vm142, %v464, 0
    %v471 = vsel %vm142, %v465, 0
    %473 = vmatpush.bf16.xpose.msra.mxu0 0
    %474 = vmatpush.bf16.xpose.msra.mxu0 0
    %475 = vmatpush.bf16.xpose.msra.mxu0 0
    %476 = vmatpush.bf16.xpose.msra.mxu0 0
    %477 = vmatpush.bf16.xpose.msra.mxu0 0
    %478 = vmatpush.bf16.xpose.msra.mxu0 0
    %479 = vmatpush.bf16.xpose.msra.mxu0 0
    %480 = vmatpush.bf16.xpose.msra.mxu0 %v471
    %481 = vmatmul.bf16.gmra.mxu0 %v468
    %v482 = vpop.f32.mrf.mxu0
    %v483 = vadd.f32 %v140, %v482
    %v484 = vpop.f32.mrf.mxu0
    %485 = vdwg.mxu0
    %v486 = vsel %vm142, %v483, -inf
    %487 = vmax.xlane.f32.xlu0 %v486
    %v488 = vpop.xlane.xlu0 %487
    %v489 = vsub.f32 %v483, %v488
    %v490 = vmul.f32 %v489, 1.442695
    %v491 = vpow.pop %v490
    %v492 = vsel %vm142, %v491, 0.0
    %493 = vadd.xlane.f32.xlu0 %v492
    %v494 = vpop.xlane.xlu0 %493
    %v495 = vpack.c.bf16 %v491, %v491
    %v497 = vsel %vm142, %v495, 0
    %v500 = vsel %vm175, %v466, 0
    %502 = vmatpush.bf16.msra.mxu0 0
    %503 = vmatpush.bf16.msra.mxu0 0
    %504 = vmatpush.bf16.msra.mxu0 0
    %505 = vmatpush.bf16.msra.mxu0 0
    %506 = vmatpush.bf16.msra.mxu0 0
    %507 = vmatpush.bf16.msra.mxu0 0
    %508 = vmatpush.bf16.msra.mxu0 0
    %509 = vmatpush.bf16.msra.mxu0 %v500
    %510 = vmatmul.bf16.gmra.mxu0 %v497
    %v511 = vpop.f32.mrf.mxu0
    %v512 = vadd.f32 0.0, %v511
    %v513 = vpop.f32.mrf.mxu0
    %514 = vdwg.mxu0
    %v515 = vrcp.pop %v494
    %v516 = vmul.f32 %v512, %v515
    %518 = vrot.lane.b32.xlu0 %v516, 16
    %v519 = vpop.permute.xlu0 %518
    %vm521 = vcmask 195712
    %522 = vst.msk [vmem:[#allocation2] sm:$0xff] %vm521, %v519
    %s523 = scalar_lea.vmem %s1, 48
    %v524 = vld [vmem:[%s523] sm:$0xf]
    %v525 = vld [vmem:[%s523 + $0x4] sm:$0xf]
    %v526 = vld [vmem:[%s523 + $0x8] sm:$0xf]
    %v527 = vld [vmem:[%s523 + $0xc] sm:$0xf]
    %s528 = scalar_lea.vmem %s2, 3
    %v529 = vld [vmem:[%s528] sm:$0x1]
    %v531 = vperm.slane %v529, 0
    %v537 = vunpack.c.l.b16 %v524
    %v538 = vunpack.c.l.b16 %v525
    %v539 = vunpack.c.l.b16 %v526
    %v540 = vunpack.c.l.b16 %v527
    %v541 = vpack.c.b16 %v538, %v537
    %v542 = vpack.c.b16 %v540, %v539
    %545 = vmatpush.bf16.msra.mxu0 0
    %546 = vmatpush.bf16.msra.mxu0 0
    %547 = vmatpush.bf16.msra.mxu0 0
    %548 = vmatpush.bf16.msra.mxu0 0
    %549 = vmatpush.bf16.msra.mxu0 0
    %550 = vmatpush.bf16.msra.mxu0 0
    %551 = vmatpush.bf16.msra.mxu0 %v542
    %552 = vmatpush.bf16.msra.mxu0 %v541
    %553 = vmatmul.bf16.gmra.mxu0 %v55
    %v554 = vpop.f32.mrf.mxu0
    %v555 = vadd.f32 %v531, %v554
    %v556 = vpop.f32.mrf.mxu0
    %557 = vdwg.mxu0
    %s558 = scalar_lea.vmem %s3, 48
    %v559 = vld [vmem:[%s558] sm:$0xf]
    %v560 = vld [vmem:[%s558 + $0x4] sm:$0xf]
    %v561 = vld [vmem:[%s558 + $0x8] sm:$0xf]
    %v562 = vld [vmem:[%s558 + $0xc] sm:$0xf]
    %s563 = scalar_lea.vmem %s4, 3
    %v564 = vld [vmem:[%s563] sm:$0x1]
    %v566 = vperm.slane %v564, 0
    %v572 = vunpack.c.l.b16 %v559
    %v573 = vunpack.c.l.b16 %v560
    %v574 = vunpack.c.l.b16 %v561
    %v575 = vunpack.c.l.b16 %v562
    %v576 = vpack.c.b16 %v573, %v572
    %v577 = vpack.c.b16 %v575, %v574
    %580 = vmatpush.bf16.msra.mxu0 0
    %581 = vmatpush.bf16.msra.mxu0 0
    %582 = vmatpush.bf16.msra.mxu0 0
    %583 = vmatpush.bf16.msra.mxu0 0
    %584 = vmatpush.bf16.msra.mxu0 0
    %585 = vmatpush.bf16.msra.mxu0 0
    %586 = vmatpush.bf16.msra.mxu0 %v577
    %587 = vmatpush.bf16.msra.mxu0 %v576
    %588 = vmatmul.bf16.gmra.mxu0 %v55
    %v589 = vpop.f32.mrf.mxu0
    %v590 = vadd.f32 %v566, %v589
    %v591 = vpop.f32.mrf.mxu0
    %592 = vdwg.mxu0
    %s593 = scalar_lea.vmem %s5, 48
    %v594 = vld [vmem:[%s593] sm:$0xf]
    %v595 = vld [vmem:[%s593 + $0x4] sm:$0xf]
    %v596 = vld [vmem:[%s593 + $0x8] sm:$0xf]
    %v597 = vld [vmem:[%s593 + $0xc] sm:$0xf]
    %s598 = scalar_lea.vmem %s6, 3
    %v599 = vld [vmem:[%s598] sm:$0x1]
    %v601 = vperm.slane %v599, 0
    %v607 = vunpack.c.l.b16 %v594
    %v608 = vunpack.c.l.b16 %v595
    %v609 = vunpack.c.l.b16 %v596
    %v610 = vunpack.c.l.b16 %v597
    %v611 = vpack.c.b16 %v608, %v607
    %v612 = vpack.c.b16 %v610, %v609
    %615 = vmatpush.bf16.msra.mxu0 0
    %616 = vmatpush.bf16.msra.mxu0 0
    %617 = vmatpush.bf16.msra.mxu0 0
    %618 = vmatpush.bf16.msra.mxu0 0
    %619 = vmatpush.bf16.msra.mxu0 0
    %620 = vmatpush.bf16.msra.mxu0 0
    %621 = vmatpush.bf16.msra.mxu0 %v612
    %622 = vmatpush.bf16.msra.mxu0 %v611
    %623 = vmatmul.bf16.gmra.mxu0 %v55
    %v624 = vpop.f32.mrf.mxu0
    %v625 = vadd.f32 %v601, %v624
    %v626 = vpop.f32.mrf.mxu0
    %627 = vdwg.mxu0
    %v628 = vpack.c.bf16 %v555, %v555
    %v629 = vpack.c.bf16 %v590, %v590
    %v630 = vpack.c.bf16 %v625, %v625
    %v632 = vsel %vm142, %v628, 0
    %v635 = vsel %vm142, %v629, 0
    %637 = vmatpush.bf16.xpose.msra.mxu0 0
    %638 = vmatpush.bf16.xpose.msra.mxu0 0
    %639 = vmatpush.bf16.xpose.msra.mxu0 0
    %640 = vmatpush.bf16.xpose.msra.mxu0 0
    %641 = vmatpush.bf16.xpose.msra.mxu0 0
    %642 = vmatpush.bf16.xpose.msra.mxu0 0
    %643 = vmatpush.bf16.xpose.msra.mxu0 0
    %644 = vmatpush.bf16.xpose.msra.mxu0 %v635
    %645 = vmatmul.bf16.gmra.mxu0 %v632
    %v646 = vpop.f32.mrf.mxu0
    %v647 = vadd.f32 %v140, %v646
    %v648 = vpop.f32.mrf.mxu0
    %649 = vdwg.mxu0
    %v650 = vsel %vm142, %v647, -inf
    %651 = vmax.xlane.f32.xlu0 %v650
    %v652 = vpop.xlane.xlu0 %651
    %v653 = vsub.f32 %v647, %v652
    %v654 = vmul.f32 %v653, 1.442695
    %v655 = vpow.pop %v654
    %v656 = vsel %vm142, %v655, 0.0
    %657 = vadd.xlane.f32.xlu0 %v656
    %v658 = vpop.xlane.xlu0 %657
    %v659 = vpack.c.bf16 %v655, %v655
    %v661 = vsel %vm142, %v659, 0
    %v664 = vsel %vm175, %v630, 0
    %666 = vmatpush.bf16.msra.mxu0 0
    %667 = vmatpush.bf16.msra.mxu0 0
    %668 = vmatpush.bf16.msra.mxu0 0
    %669 = vmatpush.bf16.msra.mxu0 0
    %670 = vmatpush.bf16.msra.mxu0 0
    %671 = vmatpush.bf16.msra.mxu0 0
    %672 = vmatpush.bf16.msra.mxu0 0
    %673 = vmatpush.bf16.msra.mxu0 %v664
    %674 = vmatmul.bf16.gmra.mxu0 %v661
    %v675 = vpop.f32.mrf.mxu0
    %v676 = vadd.f32 0.0, %v675
    %v677 = vpop.f32.mrf.mxu0
    %678 = vdwg.mxu0
    %v679 = vrcp.pop %v658
    %v680 = vmul.f32 %v676, %v679
    %682 = vrot.lane.b32.xlu0 %v680, 24
    %v683 = vpop.permute.xlu0 %682
    %vm685 = vcmask 261312
    %686 = vst.msk [vmem:[#allocation2] sm:$0xff] %vm685, %v683
    %s687 = scalar_lea.vmem %s0, 4
    %v688 = vld [vmem:[%s687] sm:$0xf]
    %s689 = scalar_lea.vmem %s7, 1
    %v690 = vld [vmem:[%s689] sm:$0x1]
    %v691 = vld [vmem:[%s1] sm:$0xf]
    %v692 = vld [vmem:[%s1 + $0x4] sm:$0xf]
    %v693 = vld [vmem:[%s1 + $0x8] sm:$0xf]
    %v694 = vld [vmem:[%s1 + $0xc] sm:$0xf]
    %v695 = vld [vmem:[%s2] sm:$0x1]
    %v697 = vperm.slane %v695, 0
    %v703 = vunpack.c.l.b16 %v691
    %v704 = vunpack.c.l.b16 %v692
    %v705 = vunpack.c.l.b16 %v693
    %v706 = vunpack.c.l.b16 %v694
    %v707 = vpack.c.b16 %v704, %v703
    %v708 = vpack.c.b16 %v706, %v705
    %v712 = vsel %vm53, %v688, 0
    %714 = vmatpush.bf16.msra.mxu0 0
    %715 = vmatpush.bf16.msra.mxu0 0
    %716 = vmatpush.bf16.msra.mxu0 0
    %717 = vmatpush.bf16.msra.mxu0 0
    %718 = vmatpush.bf16.msra.mxu0 0
    %719 = vmatpush.bf16.msra.mxu0 0
    %720 = vmatpush.bf16.msra.mxu0 %v708
    %721 = vmatpush.bf16.msra.mxu0 %v707
    %722 = vmatmul.bf16.gmra.mxu0 %v712
    %v723 = vpop.f32.mrf.mxu0
    %v724 = vadd.f32 %v697, %v723
    %v725 = vpop.f32.mrf.mxu0
    %726 = vdwg.mxu0
    %v727 = vld [vmem:[%s3] sm:$0xf]
    %v728 = vld [vmem:[%s3 + $0x4] sm:$0xf]
    %v729 = vld [vmem:[%s3 + $0x8] sm:$0xf]
    %v730 = vld [vmem:[%s3 + $0xc] sm:$0xf]
    %v731 = vld [vmem:[%s4] sm:$0x1]
    %v733 = vperm.slane %v731, 0
    %v739 = vunpack.c.l.b16 %v727
    %v740 = vunpack.c.l.b16 %v728
    %v741 = vunpack.c.l.b16 %v729
    %v742 = vunpack.c.l.b16 %v730
    %v743 = vpack.c.b16 %v740, %v739
    %v744 = vpack.c.b16 %v742, %v741
    %747 = vmatpush.bf16.msra.mxu0 0
    %748 = vmatpush.bf16.msra.mxu0 0
    %749 = vmatpush.bf16.msra.mxu0 0
    %750 = vmatpush.bf16.msra.mxu0 0
    %751 = vmatpush.bf16.msra.mxu0 0
    %752 = vmatpush.bf16.msra.mxu0 0
    %753 = vmatpush.bf16.msra.mxu0 %v744
    %754 = vmatpush.bf16.msra.mxu0 %v743
    %755 = vmatmul.bf16.gmra.mxu0 %v712
    %v756 = vpop.f32.mrf.mxu0
    %v757 = vadd.f32 %v733, %v756
    %v758 = vpop.f32.mrf.mxu0
    %759 = vdwg.mxu0
    %v760 = vld [vmem:[%s5] sm:$0xf]
    %v761 = vld [vmem:[%s5 + $0x4] sm:$0xf]
    %v762 = vld [vmem:[%s5 + $0x8] sm:$0xf]
    %v763 = vld [vmem:[%s5 + $0xc] sm:$0xf]
    %v764 = vld [vmem:[%s6] sm:$0x1]
    %v766 = vperm.slane %v764, 0
    %v772 = vunpack.c.l.b16 %v760
    %v773 = vunpack.c.l.b16 %v761
    %v774 = vunpack.c.l.b16 %v762
    %v775 = vunpack.c.l.b16 %v763
    %v776 = vpack.c.b16 %v773, %v772
    %v777 = vpack.c.b16 %v775, %v774
    %780 = vmatpush.bf16.msra.mxu0 0
    %781 = vmatpush.bf16.msra.mxu0 0
    %782 = vmatpush.bf16.msra.mxu0 0
    %783 = vmatpush.bf16.msra.mxu0 0
    %784 = vmatpush.bf16.msra.mxu0 0
    %785 = vmatpush.bf16.msra.mxu0 0
    %786 = vmatpush.bf16.msra.mxu0 %v777
    %787 = vmatpush.bf16.msra.mxu0 %v776
    %788 = vmatmul.bf16.gmra.mxu0 %v712
    %v789 = vpop.f32.mrf.mxu0
    %v790 = vadd.f32 %v766, %v789
    %v791 = vpop.f32.mrf.mxu0
    %792 = vdwg.mxu0
    %v793 = vpack.c.bf16 %v724, %v724
    %v794 = vpack.c.bf16 %v757, %v757
    %v795 = vpack.c.bf16 %v790, %v790
    %v797 = vperm.slane %v690, 0
    %v800 = vsel %vm142, %v793, 0
    %v803 = vsel %vm142, %v794, 0
    %805 = vmatpush.bf16.xpose.msra.mxu0 0
    %806 = vmatpush.bf16.xpose.msra.mxu0 0
    %807 = vmatpush.bf16.xpose.msra.mxu0 0
    %808 = vmatpush.bf16.xpose.msra.mxu0 0
    %809 = vmatpush.bf16.xpose.msra.mxu0 0
    %810 = vmatpush.bf16.xpose.msra.mxu0 0
    %811 = vmatpush.bf16.xpose.msra.mxu0 0
    %812 = vmatpush.bf16.xpose.msra.mxu0 %v803
    %813 = vmatmul.bf16.gmra.mxu0 %v800
    %v814 = vpop.f32.mrf.mxu0
    %v815 = vadd.f32 %v797, %v814
    %v816 = vpop.f32.mrf.mxu0
    %817 = vdwg.mxu0
    %v818 = vsel %vm142, %v815, -inf
    %819 = vmax.xlane.f32.xlu0 %v818
    %v820 = vpop.xlane.xlu0 %819
    %v821 = vsub.f32 %v815, %v820
    %v822 = vmul.f32 %v821, 1.442695
    %v823 = vpow.pop %v822
    %v824 = vsel %vm142, %v823, 0.0
    %825 = vadd.xlane.f32.xlu0 %v824
    %v826 = vpop.xlane.xlu0 %825
    %v827 = vpack.c.bf16 %v823, %v823
    %v829 = vsel %vm142, %v827, 0
    %v832 = vsel %vm175, %v795, 0
    %834 = vmatpush.bf16.msra.mxu0 0
    %835 = vmatpush.bf16.msra.mxu0 0
    %836 = vmatpush.bf16.msra.mxu0 0
    %837 = vmatpush.bf16.msra.mxu0 0
    %838 = vmatpush.bf16.msra.mxu0 0
    %839 = vmatpush.bf16.msra.mxu0 0
    %840 = vmatpush.bf16.msra.mxu0 0
    %841 = vmatpush.bf16.msra.mxu0 %v832
    %842 = vmatmul.bf16.gmra.mxu0 %v829
    %v843 = vpop.f32.mrf.mxu0
    %v844 = vadd.f32 0.0, %v843
    %v845 = vpop.f32.mrf.mxu0
    %846 = vdwg.mxu0
    %v847 = vrcp.pop %v826
    %v848 = vmul.f32 %v844, %v847
    %s849 = scalar_lea.vmem [#allocation2], 8
    %850 = vst.msk [vmem:[%s849] sm:$0xff] %vm142, %v848
    %v851 = vld [vmem:[%s195] sm:$0xf]
    %v852 = vld [vmem:[%s195 + $0x4] sm:$0xf]
    %v853 = vld [vmem:[%s195 + $0x8] sm:$0xf]
    %v854 = vld [vmem:[%s195 + $0xc] sm:$0xf]
    %v855 = vld [vmem:[%s200] sm:$0x1]
    %v857 = vperm.slane %v855, 0
    %v863 = vunpack.c.l.b16 %v851
    %v864 = vunpack.c.l.b16 %v852
    %v865 = vunpack.c.l.b16 %v853
    %v866 = vunpack.c.l.b16 %v854
    %v867 = vpack.c.b16 %v864, %v863
    %v868 = vpack.c.b16 %v866, %v865
    %871 = vmatpush.bf16.msra.mxu0 0
    %872 = vmatpush.bf16.msra.mxu0 0
    %873 = vmatpush.bf16.msra.mxu0 0
    %874 = vmatpush.bf16.msra.mxu0 0
    %875 = vmatpush.bf16.msra.mxu0 0
    %876 = vmatpush.bf16.msra.mxu0 0
    %877 = vmatpush.bf16.msra.mxu0 %v868
    %878 = vmatpush.bf16.msra.mxu0 %v867
    %879 = vmatmul.bf16.gmra.mxu0 %v712
    %v880 = vpop.f32.mrf.mxu0
    %v881 = vadd.f32 %v857, %v880
    %v882 = vpop.f32.mrf.mxu0
    %883 = vdwg.mxu0
    %v884 = vld [vmem:[%s230] sm:$0xf]
    %v885 = vld [vmem:[%s230 + $0x4] sm:$0xf]
    %v886 = vld [vmem:[%s230 + $0x8] sm:$0xf]
    %v887 = vld [vmem:[%s230 + $0xc] sm:$0xf]
    %v888 = vld [vmem:[%s235] sm:$0x1]
    %v890 = vperm.slane %v888, 0
    %v896 = vunpack.c.l.b16 %v884
    %v897 = vunpack.c.l.b16 %v885
    %v898 = vunpack.c.l.b16 %v886
    %v899 = vunpack.c.l.b16 %v887
    %v900 = vpack.c.b16 %v897, %v896
    %v901 = vpack.c.b16 %v899, %v898
    %904 = vmatpush.bf16.msra.mxu0 0
    %905 = vmatpush.bf16.msra.mxu0 0
    %906 = vmatpush.bf16.msra.mxu0 0
    %907 = vmatpush.bf16.msra.mxu0 0
    %908 = vmatpush.bf16.msra.mxu0 0
    %909 = vmatpush.bf16.msra.mxu0 0
    %910 = vmatpush.bf16.msra.mxu0 %v901
    %911 = vmatpush.bf16.msra.mxu0 %v900
    %912 = vmatmul.bf16.gmra.mxu0 %v712
    %v913 = vpop.f32.mrf.mxu0
    %v914 = vadd.f32 %v890, %v913
    %v915 = vpop.f32.mrf.mxu0
    %916 = vdwg.mxu0
    %v917 = vld [vmem:[%s265] sm:$0xf]
    %v918 = vld [vmem:[%s265 + $0x4] sm:$0xf]
    %v919 = vld [vmem:[%s265 + $0x8] sm:$0xf]
    %v920 = vld [vmem:[%s265 + $0xc] sm:$0xf]
    %v921 = vld [vmem:[%s270] sm:$0x1]
    %v923 = vperm.slane %v921, 0
    %v929 = vunpack.c.l.b16 %v917
    %v930 = vunpack.c.l.b16 %v918
    %v931 = vunpack.c.l.b16 %v919
    %v932 = vunpack.c.l.b16 %v920
    %v933 = vpack.c.b16 %v930, %v929
    %v934 = vpack.c.b16 %v932, %v931
    %937 = vmatpush.bf16.msra.mxu0 0
    %938 = vmatpush.bf16.msra.mxu0 0
    %939 = vmatpush.bf16.msra.mxu0 0
    %940 = vmatpush.bf16.msra.mxu0 0
    %941 = vmatpush.bf16.msra.mxu0 0
    %942 = vmatpush.bf16.msra.mxu0 0
    %943 = vmatpush.bf16.msra.mxu0 %v934
    %944 = vmatpush.bf16.msra.mxu0 %v933
    %945 = vmatmul.bf16.gmra.mxu0 %v712
    %v946 = vpop.f32.mrf.mxu0
    %v947 = vadd.f32 %v923, %v946
    %v948 = vpop.f32.mrf.mxu0
    %949 = vdwg.mxu0
    %v950 = vpack.c.bf16 %v881, %v881
    %v951 = vpack.c.bf16 %v914, %v914
    %v952 = vpack.c.bf16 %v947, %v947
    %v954 = vsel %vm142, %v950, 0
    %v957 = vsel %vm142, %v951, 0
    %959 = vmatpush.bf16.xpose.msra.mxu0 0
    %960 = vmatpush.bf16.xpose.msra.mxu0 0
    %961 = vmatpush.bf16.xpose.msra.mxu0 0
    %962 = vmatpush.bf16.xpose.msra.mxu0 0
    %963 = vmatpush.bf16.xpose.msra.mxu0 0
    %964 = vmatpush.bf16.xpose.msra.mxu0 0
    %965 = vmatpush.bf16.xpose.msra.mxu0 0
    %966 = vmatpush.bf16.xpose.msra.mxu0 %v957
    %967 = vmatmul.bf16.gmra.mxu0 %v954
    %v968 = vpop.f32.mrf.mxu0
    %v969 = vadd.f32 %v797, %v968
    %v970 = vpop.f32.mrf.mxu0
    %971 = vdwg.mxu0
    %v972 = vsel %vm142, %v969, -inf
    %973 = vmax.xlane.f32.xlu0 %v972
    %v974 = vpop.xlane.xlu0 %973
    %v975 = vsub.f32 %v969, %v974
    %v976 = vmul.f32 %v975, 1.442695
    %v977 = vpow.pop %v976
    %v978 = vsel %vm142, %v977, 0.0
    %979 = vadd.xlane.f32.xlu0 %v978
    %v980 = vpop.xlane.xlu0 %979
    %v981 = vpack.c.bf16 %v977, %v977
    %v983 = vsel %vm142, %v981, 0
    %v986 = vsel %vm175, %v952, 0
    %988 = vmatpush.bf16.msra.mxu0 0
    %989 = vmatpush.bf16.msra.mxu0 0
    %990 = vmatpush.bf16.msra.mxu0 0
    %991 = vmatpush.bf16.msra.mxu0 0
    %992 = vmatpush.bf16.msra.mxu0 0
    %993 = vmatpush.bf16.msra.mxu0 0
    %994 = vmatpush.bf16.msra.mxu0 0
    %995 = vmatpush.bf16.msra.mxu0 %v986
    %996 = vmatmul.bf16.gmra.mxu0 %v983
    %v997 = vpop.f32.mrf.mxu0
    %v998 = vadd.f32 0.0, %v997
    %v999 = vpop.f32.mrf.mxu0
    %1000 = vdwg.mxu0
    %v1001 = vrcp.pop %v980
    %v1002 = vmul.f32 %v998, %v1001
    %1004 = vrot.lane.b32.xlu0 %v1002, 8
    %v1005 = vpop.permute.xlu0 %1004
    %1007 = vst.msk [vmem:[%s849] sm:$0xff] %vm357, %v1005
    %v1008 = vld [vmem:[%s359] sm:$0xf]
    %v1009 = vld [vmem:[%s359 + $0x4] sm:$0xf]
    %v1010 = vld [vmem:[%s359 + $0x8] sm:$0xf]
    %v1011 = vld [vmem:[%s359 + $0xc] sm:$0xf]
    %v1012 = vld [vmem:[%s364] sm:$0x1]
    %v1014 = vperm.slane %v1012, 0
    %v1020 = vunpack.c.l.b16 %v1008
    %v1021 = vunpack.c.l.b16 %v1009
    %v1022 = vunpack.c.l.b16 %v1010
    %v1023 = vunpack.c.l.b16 %v1011
    %v1024 = vpack.c.b16 %v1021, %v1020
    %v1025 = vpack.c.b16 %v1023, %v1022
    %1028 = vmatpush.bf16.msra.mxu0 0
    %1029 = vmatpush.bf16.msra.mxu0 0
    %1030 = vmatpush.bf16.msra.mxu0 0
    %1031 = vmatpush.bf16.msra.mxu0 0
    %1032 = vmatpush.bf16.msra.mxu0 0
    %1033 = vmatpush.bf16.msra.mxu0 0
    %1034 = vmatpush.bf16.msra.mxu0 %v1025
    %1035 = vmatpush.bf16.msra.mxu0 %v1024
    %1036 = vmatmul.bf16.gmra.mxu0 %v712
    %v1037 = vpop.f32.mrf.mxu0
    %v1038 = vadd.f32 %v1014, %v1037
    %v1039 = vpop.f32.mrf.mxu0
    %1040 = vdwg.mxu0
    %v1041 = vld [vmem:[%s394] sm:$0xf]
    %v1042 = vld [vmem:[%s394 + $0x4] sm:$0xf]
    %v1043 = vld [vmem:[%s394 + $0x8] sm:$0xf]
    %v1044 = vld [vmem:[%s394 + $0xc] sm:$0xf]
    %v1045 = vld [vmem:[%s399] sm:$0x1]
    %v1047 = vperm.slane %v1045, 0
    %v1053 = vunpack.c.l.b16 %v1041
    %v1054 = vunpack.c.l.b16 %v1042
    %v1055 = vunpack.c.l.b16 %v1043
    %v1056 = vunpack.c.l.b16 %v1044
    %v1057 = vpack.c.b16 %v1054, %v1053
    %v1058 = vpack.c.b16 %v1056, %v1055
    %1061 = vmatpush.bf16.msra.mxu0 0
    %1062 = vmatpush.bf16.msra.mxu0 0
    %1063 = vmatpush.bf16.msra.mxu0 0
    %1064 = vmatpush.bf16.msra.mxu0 0
    %1065 = vmatpush.bf16.msra.mxu0 0
    %1066 = vmatpush.bf16.msra.mxu0 0
    %1067 = vmatpush.bf16.msra.mxu0 %v1058
    %1068 = vmatpush.bf16.msra.mxu0 %v1057
    %1069 = vmatmul.bf16.gmra.mxu0 %v712
    %v1070 = vpop.f32.mrf.mxu0
    %v1071 = vadd.f32 %v1047, %v1070
    %v1072 = vpop.f32.mrf.mxu0
    %1073 = vdwg.mxu0
    %v1074 = vld [vmem:[%s429] sm:$0xf]
    %v1075 = vld [vmem:[%s429 + $0x4] sm:$0xf]
    %v1076 = vld [vmem:[%s429 + $0x8] sm:$0xf]
    %v1077 = vld [vmem:[%s429 + $0xc] sm:$0xf]
    %v1078 = vld [vmem:[%s434] sm:$0x1]
    %v1080 = vperm.slane %v1078, 0
    %v1086 = vunpack.c.l.b16 %v1074
    %v1087 = vunpack.c.l.b16 %v1075
    %v1088 = vunpack.c.l.b16 %v1076
    %v1089 = vunpack.c.l.b16 %v1077
    %v1090 = vpack.c.b16 %v1087, %v1086
    %v1091 = vpack.c.b16 %v1089, %v1088
    %1094 = vmatpush.bf16.msra.mxu0 0
    %1095 = vmatpush.bf16.msra.mxu0 0
    %1096 = vmatpush.bf16.msra.mxu0 0
    %1097 = vmatpush.bf16.msra.mxu0 0
    %1098 = vmatpush.bf16.msra.mxu0 0
    %1099 = vmatpush.bf16.msra.mxu0 0
    %1100 = vmatpush.bf16.msra.mxu0 %v1091
    %1101 = vmatpush.bf16.msra.mxu0 %v1090
    %1102 = vmatmul.bf16.gmra.mxu0 %v712
    %v1103 = vpop.f32.mrf.mxu0
    %v1104 = vadd.f32 %v1080, %v1103
    %v1105 = vpop.f32.mrf.mxu0
    %1106 = vdwg.mxu0
    %v1107 = vpack.c.bf16 %v1038, %v1038
    %v1108 = vpack.c.bf16 %v1071, %v1071
    %v1109 = vpack.c.bf16 %v1104, %v1104
    %v1111 = vsel %vm142, %v1107, 0
    %v1114 = vsel %vm142, %v1108, 0
    %1116 = vmatpush.bf16.xpose.msra.mxu0 0
    %1117 = vmatpush.bf16.xpose.msra.mxu0 0
    %1118 = vmatpush.bf16.xpose.msra.mxu0 0
    %1119 = vmatpush.bf16.xpose.msra.mxu0 0
    %1120 = vmatpush.bf16.xpose.msra.mxu0 0
    %1121 = vmatpush.bf16.xpose.msra.mxu0 0
    %1122 = vmatpush.bf16.xpose.msra.mxu0 0
    %1123 = vmatpush.bf16.xpose.msra.mxu0 %v1114
    %1124 = vmatmul.bf16.gmra.mxu0 %v1111
    %v1125 = vpop.f32.mrf.mxu0
    %v1126 = vadd.f32 %v797, %v1125
    %v1127 = vpop.f32.mrf.mxu0
    %1128 = vdwg.mxu0
    %v1129 = vsel %vm142, %v1126, -inf
    %1130 = vmax.xlane.f32.xlu0 %v1129
    %v1131 = vpop.xlane.xlu0 %1130
    %v1132 = vsub.f32 %v1126, %v1131
    %v1133 = vmul.f32 %v1132, 1.442695
    %v1134 = vpow.pop %v1133
    %v1135 = vsel %vm142, %v1134, 0.0
    %1136 = vadd.xlane.f32.xlu0 %v1135
    %v1137 = vpop.xlane.xlu0 %1136
    %v1138 = vpack.c.bf16 %v1134, %v1134
    %v1140 = vsel %vm142, %v1138, 0
    %v1143 = vsel %vm175, %v1109, 0
    %1145 = vmatpush.bf16.msra.mxu0 0
    %1146 = vmatpush.bf16.msra.mxu0 0
    %1147 = vmatpush.bf16.msra.mxu0 0
    %1148 = vmatpush.bf16.msra.mxu0 0
    %1149 = vmatpush.bf16.msra.mxu0 0
    %1150 = vmatpush.bf16.msra.mxu0 0
    %1151 = vmatpush.bf16.msra.mxu0 0
    %1152 = vmatpush.bf16.msra.mxu0 %v1143
    %1153 = vmatmul.bf16.gmra.mxu0 %v1140
    %v1154 = vpop.f32.mrf.mxu0
    %v1155 = vadd.f32 0.0, %v1154
    %v1156 = vpop.f32.mrf.mxu0
    %1157 = vdwg.mxu0
    %v1158 = vrcp.pop %v1137
    %v1159 = vmul.f32 %v1155, %v1158
    %1161 = vrot.lane.b32.xlu0 %v1159, 16
    %v1162 = vpop.permute.xlu0 %1161
    %1164 = vst.msk [vmem:[%s849] sm:$0xff] %vm521, %v1162
    %v1165 = vld [vmem:[%s523] sm:$0xf]
    %v1166 = vld [vmem:[%s523 + $0x4] sm:$0xf]
    %v1167 = vld [vmem:[%s523 + $0x8] sm:$0xf]
    %v1168 = vld [vmem:[%s523 + $0xc] sm:$0xf]
    %v1169 = vld [vmem:[%s528] sm:$0x1]
    %v1171 = vperm.slane %v1169, 0
    %v1177 = vunpack.c.l.b16 %v1165
    %v1178 = vunpack.c.l.b16 %v1166
    %v1179 = vunpack.c.l.b16 %v1167
    %v1180 = vunpack.c.l.b16 %v1168
    %v1181 = vpack.c.b16 %v1178, %v1177
    %v1182 = vpack.c.b16 %v1180, %v1179
    %1185 = vmatpush.bf16.msra.mxu0 0
    %1186 = vmatpush.bf16.msra.mxu0 0
    %1187 = vmatpush.bf16.msra.mxu0 0
    %1188 = vmatpush.bf16.msra.mxu0 0
    %1189 = vmatpush.bf16.msra.mxu0 0
    %1190 = vmatpush.bf16.msra.mxu0 0
    %1191 = vmatpush.bf16.msra.mxu0 %v1182
    %1192 = vmatpush.bf16.msra.mxu0 %v1181
    %1193 = vmatmul.bf16.gmra.mxu0 %v712
    %v1194 = vpop.f32.mrf.mxu0
    %v1195 = vadd.f32 %v1171, %v1194
    %v1196 = vpop.f32.mrf.mxu0
    %1197 = vdwg.mxu0
    %v1198 = vld [vmem:[%s558] sm:$0xf]
    %v1199 = vld [vmem:[%s558 + $0x4] sm:$0xf]
    %v1200 = vld [vmem:[%s558 + $0x8] sm:$0xf]
    %v1201 = vld [vmem:[%s558 + $0xc] sm:$0xf]
    %v1202 = vld [vmem:[%s563] sm:$0x1]
    %v1204 = vperm.slane %v1202, 0
    %v1210 = vunpack.c.l.b16 %v1198
    %v1211 = vunpack.c.l.b16 %v1199
    %v1212 = vunpack.c.l.b16 %v1200
    %v1213 = vunpack.c.l.b16 %v1201
    %v1214 = vpack.c.b16 %v1211, %v1210
    %v1215 = vpack.c.b16 %v1213, %v1212
    %1218 = vmatpush.bf16.msra.mxu0 0
    %1219 = vmatpush.bf16.msra.mxu0 0
    %1220 = vmatpush.bf16.msra.mxu0 0
    %1221 = vmatpush.bf16.msra.mxu0 0
    %1222 = vmatpush.bf16.msra.mxu0 0
    %1223 = vmatpush.bf16.msra.mxu0 0
    %1224 = vmatpush.bf16.msra.mxu0 %v1215
    %1225 = vmatpush.bf16.msra.mxu0 %v1214
    %1226 = vmatmul.bf16.gmra.mxu0 %v712
    %v1227 = vpop.f32.mrf.mxu0
    %v1228 = vadd.f32 %v1204, %v1227
    %v1229 = vpop.f32.mrf.mxu0
    %1230 = vdwg.mxu0
    %v1231 = vld [vmem:[%s593] sm:$0xf]
    %v1232 = vld [vmem:[%s593 + $0x4] sm:$0xf]
    %v1233 = vld [vmem:[%s593 + $0x8] sm:$0xf]
    %v1234 = vld [vmem:[%s593 + $0xc] sm:$0xf]
    %v1235 = vld [vmem:[%s598] sm:$0x1]
    %v1237 = vperm.slane %v1235, 0
    %v1243 = vunpack.c.l.b16 %v1231
    %v1244 = vunpack.c.l.b16 %v1232
    %v1245 = vunpack.c.l.b16 %v1233
    %v1246 = vunpack.c.l.b16 %v1234
    %v1247 = vpack.c.b16 %v1244, %v1243
    %v1248 = vpack.c.b16 %v1246, %v1245
    %1251 = vmatpush.bf16.msra.mxu0 0
    %1252 = vmatpush.bf16.msra.mxu0 0
    %1253 = vmatpush.bf16.msra.mxu0 0
    %1254 = vmatpush.bf16.msra.mxu0 0
    %1255 = vmatpush.bf16.msra.mxu0 0
    %1256 = vmatpush.bf16.msra.mxu0 0
    %1257 = vmatpush.bf16.msra.mxu0 %v1248
    %1258 = vmatpush.bf16.msra.mxu0 %v1247
    %1259 = vmatmul.bf16.gmra.mxu0 %v712
    %v1260 = vpop.f32.mrf.mxu0
    %v1261 = vadd.f32 %v1237, %v1260
    %v1262 = vpop.f32.mrf.mxu0
    %1263 = vdwg.mxu0
    %v1264 = vpack.c.bf16 %v1195, %v1195
    %v1265 = vpack.c.bf16 %v1228, %v1228
    %v1266 = vpack.c.bf16 %v1261, %v1261
    %v1268 = vsel %vm142, %v1264, 0
    %v1271 = vsel %vm142, %v1265, 0
    %1273 = vmatpush.bf16.xpose.msra.mxu0 0
    %1274 = vmatpush.bf16.xpose.msra.mxu0 0
    %1275 = vmatpush.bf16.xpose.msra.mxu0 0
    %1276 = vmatpush.bf16.xpose.msra.mxu0 0
    %1277 = vmatpush.bf16.xpose.msra.mxu0 0
    %1278 = vmatpush.bf16.xpose.msra.mxu0 0
    %1279 = vmatpush.bf16.xpose.msra.mxu0 0
    %1280 = vmatpush.bf16.xpose.msra.mxu0 %v1271
    %1281 = vmatmul.bf16.gmra.mxu0 %v1268
    %v1282 = vpop.f32.mrf.mxu0
    %v1283 = vadd.f32 %v797, %v1282
    %v1284 = vpop.f32.mrf.mxu0
    %1285 = vdwg.mxu0
    %v1286 = vsel %vm142, %v1283, -inf
    %1287 = vmax.xlane.f32.xlu0 %v1286
    %v1288 = vpop.xlane.xlu0 %1287
    %v1289 = vsub.f32 %v1283, %v1288
    %v1290 = vmul.f32 %v1289, 1.442695
    %v1291 = vpow.pop %v1290
    %v1292 = vsel %vm142, %v1291, 0.0
    %1293 = vadd.xlane.f32.xlu0 %v1292
    %v1294 = vpop.xlane.xlu0 %1293
    %v1295 = vpack.c.bf16 %v1291, %v1291
    %v1297 = vsel %vm142, %v1295, 0
    %v1300 = vsel %vm175, %v1266, 0
    %1302 = vmatpush.bf16.msra.mxu0 0
    %1303 = vmatpush.bf16.msra.mxu0 0
    %1304 = vmatpush.bf16.msra.mxu0 0
    %1305 = vmatpush.bf16.msra.mxu0 0
    %1306 = vmatpush.bf16.msra.mxu0 0
    %1307 = vmatpush.bf16.msra.mxu0 0
    %1308 = vmatpush.bf16.msra.mxu0 0
    %1309 = vmatpush.bf16.msra.mxu0 %v1300
    %1310 = vmatmul.bf16.gmra.mxu0 %v1297
    %v1311 = vpop.f32.mrf.mxu0
    %v1312 = vadd.f32 0.0, %v1311
    %v1313 = vpop.f32.mrf.mxu0
    %1314 = vdwg.mxu0
    %v1315 = vrcp.pop %v1294
    %v1316 = vmul.f32 %v1312, %v1315
    %1318 = vrot.lane.b32.xlu0 %v1316, 24
    %v1319 = vpop.permute.xlu0 %1318
    %1321 = vst.msk [vmem:[%s849] sm:$0xff] %vm685, %v1319
    // Predicated region
    $region34: #{tpu_custom_call.1} parent=1 // pred_check
      _
    $region35: #{tpu_custom_call.1} parent=1 // pred_check_branch
      %1323 = sbr.rel (0) target = $region37
    $region36: #{tpu_custom_call.1} parent=1 // pred_region
      %1325 = vsyncadd [#allocation3], 0
      %s1326 = sshll.u32 [#allocation2], 4
      %s1327 = int_to_ptr.vmem [resolvable:$true] %s1326
      %s1328 = sshll.u32 %s8, 4
      %s1329 = int_to_ptr.hbm [resolvable:$true] %s1328
      %1334 = dma.vmem_to_hbm [thread:$0]  %s1327, 256, %s1329, [#allocation3], 128, 128, 8
    $region37: #{tpu_custom_call.1} parent=1 // pred_fallthru
      _
    // Predicated region
    $region38: #{tpu_custom_call.1} parent=1 // pred_check
      _
    $region39: #{tpu_custom_call.1} parent=1 // pred_check_branch
      %1336 = sbr.rel (0) target = $region41
    $region40: #{tpu_custom_call.1} parent=1 // pred_region
      %1338 = dma.done [#allocation3], 256
    $region41: #{tpu_custom_call.1} parent=1 // pred_fallthru
      _
    %1339 = vsyncpa [#allocation3], 1

</llo_original>
